<compile_context>
chip_gen: v7x
topology: tpu7x:2x2x1
jax: 0.10.0
libtpu: 0.0.40
codegen_flags: <defaults>
</compile_context>

<pallas_src>
import math
import functools

import jax
import jax.numpy as jnp
from jax.experimental import pallas as pl
from jax.experimental.pallas import tpu as pltpu

# ---------------- Small-but-consistent ModelArgs ----------------------------
DIM = 32
N_LAYERS = 2
N_HEADS = 4
N_KV_HEADS = 2
VOCAB = 64
MULTIPLE_OF = 16
NORM_EPS = 1e-5
ROPE_THETA = 10000.0
MAX_SEQ_LEN = 16
MAX_BATCH = 4

HEAD_DIM = DIM // N_HEADS          # 8
N_REP = N_HEADS // N_KV_HEADS      # 2
Q_DIM = N_HEADS * HEAD_DIM         # 32
KV_DIM = N_KV_HEADS * HEAD_DIM     # 16
QKV_DIM = Q_DIM + 2 * KV_DIM       # 64


def _ffn_hidden_dim(dim, multiple_of):
    hidden = 4 * dim
    hidden = int(2 * hidden / 3)
    return multiple_of * ((hidden + multiple_of - 1) // multiple_of)


FFN_HIDDEN = _ffn_hidden_dim(DIM, MULTIPLE_OF)  # 96


# ---------------- The single fused Pallas kernel ------------------------------
def _transformer_kernel(x_ref, cos_ref, sin_ref, mask_ref,
                        anorm_ref, wqkv_ref, wqkvs_ref, wo_ref,
                        fnorm_ref, w1_ref, w3_ref, w2_ref,
                        onorm_ref, wout_ref,
                        logits_ref,
                        h_scratch,
                        *, eps, start_pos, n_layers, n_heads, n_rep, head_dim):
    """One TransformerBlock per grid step; residual stream carried in VMEM scratch."""
    l = pl.program_id(1)
    scale = 1.0 / math.sqrt(head_dim)

    # Initialize the residual carry from the token embeddings on layer 0.
    @pl.when(l == 0)
    def _():
        h_scratch[...] = x_ref[0].astype(jnp.float32)

    x = h_scratch[...]                                   # (S, D)

    # ---- RMSNorm (attention) + fused QKV projection + RoPE ------------------
    ms = jnp.mean(x * x, axis=-1, keepdims=True)
    xn = x * jax.lax.rsqrt(ms + eps) * anorm_ref[0].astype(jnp.float32)
    qkv = jnp.dot(xn, wqkv_ref[0], preferred_element_type=jnp.float32)
    qkv_sw = jnp.dot(xn, wqkvs_ref[0], preferred_element_type=jnp.float32)
    # RoPE(interleaved pairs) == qkv*cosf + qkv_pairswapped*sinf  (elementwise FMA)
    qkv = qkv * cos_ref[...] + qkv_sw * sin_ref[...]

    q = qkv[:, :Q_DIM] * scale                           # scale folded into q
    k = qkv[:, Q_DIM:Q_DIM + KV_DIM]
    v = qkv[:, Q_DIM + KV_DIM:]
    if start_pos > 0:
        # Fresh zero KV-cache prefix (cache is re-initialised each call; see TODO).
        zpad = jnp.zeros((start_pos, KV_DIM), jnp.float32)
        k = jnp.concatenate([zpad, k], axis=0)
        v = jnp.concatenate([zpad, v], axis=0)

    mask = mask_ref[...]                                 # (S, T)
    outs = []
    for h in range(n_heads):                             # static unroll, tiny H
        g = h // n_rep                                   # GQA: query head -> kv head
        qh = q[:, h * head_dim:(h + 1) * head_dim]
        kh = k[:, g * head_dim:(g + 1) * head_dim]
        vh = v[:, g * head_dim:(g + 1) * head_dim]
        s = jnp.dot(qh, kh.T, preferred_element_type=jnp.float32) + mask
        s = s - jnp.max(s, axis=-1, keepdims=True)
        p = jnp.exp(s)
        p = p * pl.reciprocal(jnp.sum(p, axis=-1, keepdims=True), approx=True)
        outs.append(jnp.dot(p, vh, preferred_element_type=jnp.float32))
    attn = jnp.concatenate(outs, axis=-1)                # (S, H*Dh)
    h1 = x + jnp.dot(attn, wo_ref[0], preferred_element_type=jnp.float32)

    # ---- RMSNorm (ffn) + SwiGLU FFN + residual -------------------------------
    ms2 = jnp.mean(h1 * h1, axis=-1, keepdims=True)
    hn = h1 * jax.lax.rsqrt(ms2 + eps) * fnorm_ref[0].astype(jnp.float32)
    a = jnp.dot(hn, w1_ref[0], preferred_element_type=jnp.float32)
    b = jnp.dot(hn, w3_ref[0], preferred_element_type=jnp.float32)
    g = (a * jax.nn.sigmoid(a)) * b
    out = h1 + jnp.dot(g, w2_ref[0], preferred_element_type=jnp.float32)
    h_scratch[...] = out                                 # carry to next layer

    # ---- Final RMSNorm + LM head, only on the last layer ---------------------
    @pl.when(l == n_layers - 1)
    def _():
        ms3 = jnp.mean(out * out, axis=-1, keepdims=True)
        on = out * jax.lax.rsqrt(ms3 + eps) * onorm_ref[...].astype(jnp.float32)
        logits_ref[0] = jnp.dot(on, wout_ref[...],
                                preferred_element_type=jnp.float32)


# ---------------- RoPE tables (glue, plain JAX, shared by all layers) --------
def precompute_freqs(dim, end, theta):
    freqs = 1.0 / theta ** (jnp.arange(0, dim, 2)[: dim // 2].astype(jnp.float32) / dim)
    t = jnp.arange(end, dtype=jnp.float32)
    freqs = jnp.outer(t, freqs)
    return jnp.cos(freqs), jnp.sin(freqs)


def build_rope_lane_tables(cos, sin):
    # cos/sin: (S, HEAD_DIM//2).  Per-position lane tables of width QKV_DIM so
    # RoPE inside the kernel is a pure elementwise FMA on the QKV matmul outputs.
    s = cos.shape[0]
    cos_pair = jnp.repeat(cos, 2, axis=-1)                           # [c0,c0,c1,c1,...]
    sin_pair = jnp.stack([-sin, sin], axis=-1).reshape(s, HEAD_DIM)  # [-s0,s0,-s1,s1,...]
    n_rot = N_HEADS + N_KV_HEADS                                     # q + k heads rotated
    cosf = jnp.concatenate(
        [jnp.tile(cos_pair, (1, n_rot)), jnp.ones((s, KV_DIM), jnp.float32)], axis=-1)
    sinf = jnp.concatenate(
        [jnp.tile(sin_pair, (1, n_rot)), jnp.zeros((s, KV_DIM), jnp.float32)], axis=-1)
    return cosf, sinf                                                # (S, QKV_DIM)


# ---------------- Parameter init (weights stacked over layers) ----------------
def _pair_swap_cols(w):
    d, n = w.shape
    return w.reshape(d, n // 2, 2)[:, :, ::-1].reshape(d, n)


def init_params(key):
    def w(k, shape, scale=0.02):
        return scale * jax.random.normal(k, shape, dtype=jnp.float32)

    n_per_layer = 7
    keys = jax.random.split(key, 2 + N_LAYERS * n_per_layer)
    cos, sin = precompute_freqs(HEAD_DIM, MAX_SEQ_LEN * 2, ROPE_THETA)
    params = {
        "tok_emb": w(keys[0], (VOCAB, DIM)),
        "output_w": w(keys[1], (DIM, VOCAB)),
        "norm_w": jnp.ones((DIM,), jnp.float32),
        "freqs_cos": cos,
        "freqs_sin": sin,
    }
    wqkv_l, wqkvs_l, wo_l, w1_l, w3_l, w2_l = [], [], [], [], [], []
    for layer in range(N_LAYERS):
        ks = keys[2 + layer * n_per_layer: 2 + (layer + 1) * n_per_layer]
        wq = w(ks[0], (DIM, Q_DIM))
        wk = w(ks[1], (DIM, KV_DIM))
        wv = w(ks[2], (DIM, KV_DIM))
        wqk = jnp.concatenate([wq, wk], axis=1)
        wqkv_l.append(jnp.concatenate([wqk, wv], axis=1))
        wqkvs_l.append(jnp.concatenate([_pair_swap_cols(wqk), wv], axis=1))
        wo_l.append(w(ks[3], (Q_DIM, DIM)))
        w1_l.append(w(ks[4], (DIM, FFN_HIDDEN)))
        w3_l.append(w(ks[5], (DIM, FFN_HIDDEN)))
        w2_l.append(w(ks[6], (FFN_HIDDEN, DIM)))
    params.update({
        "wqkv": jnp.stack(wqkv_l),                 # (L, D, QKV)
        "wqkv_swap": jnp.stack(wqkvs_l),           # (L, D, QKV)
        "wo": jnp.stack(wo_l),                     # (L, Q_DIM, D)
        "w1": jnp.stack(w1_l),                     # (L, D, F)
        "w3": jnp.stack(w3_l),                     # (L, D, F)
        "w2": jnp.stack(w2_l),                     # (L, F, D)
        "attn_norm": jnp.ones((N_LAYERS, 1, DIM), jnp.float32),
        "ffn_norm": jnp.ones((N_LAYERS, 1, DIM), jnp.float32),
    })
    return params


# ---------------- Forward pass -------------------------------------------------
@functools.partial(jax.jit, static_argnums=(2,))
def transformer_forward(params, tokens, start_pos):
    B, S = tokens.shape
    T = start_pos + S
    h = params["tok_emb"][tokens].astype(jnp.float32)          # (B, S, D) embedding gather (glue)

    cos = params["freqs_cos"][start_pos:start_pos + S]
    sin = params["freqs_sin"][start_pos:start_pos + S]
    cosf, sinf = build_rope_lane_tables(cos, sin)              # (S, QKV_DIM)

    # (S, T) mask: zeros over the cached prefix, strict causal over new tokens.
    causal = jnp.triu(jnp.full((S, S), float("-inf"), dtype=jnp.float32), k=1)
    if start_pos > 0:
        mask = jnp.concatenate(
            [jnp.zeros((S, start_pos), jnp.float32), causal], axis=1)
    else:
        mask = causal

    # TODO(synk): persist the KV cache across calls (input_output_aliases) for real
    #             multi-step decode; here each call starts from a fresh zero cache.

    kernel = functools.partial(
        _transformer_kernel, eps=NORM_EPS, start_pos=start_pos,
        n_layers=N_LAYERS, n_heads=N_HEADS, n_rep=N_REP, head_dim=HEAD_DIM)

    logits = pl.pallas_call(
        kernel,
        out_shape=jax.ShapeDtypeStruct((B, S, VOCAB), jnp.float32),
        grid=(B, N_LAYERS),
        in_specs=[
            pl.BlockSpec((1, S, DIM), lambda b, l: (b, 0, 0)),           # x (embeddings)
            pl.BlockSpec((S, QKV_DIM), lambda b, l: (0, 0)),             # RoPE cos table
            pl.BlockSpec((S, QKV_DIM), lambda b, l: (0, 0)),             # RoPE sin table
            pl.BlockSpec((S, T), lambda b, l: (0, 0)),                   # attention mask
            pl.BlockSpec((1, 1, DIM), lambda b, l: (l, 0, 0)),           # attn RMSNorm w
            pl.BlockSpec((1, DIM, QKV_DIM), lambda b, l: (l, 0, 0)),     # Wqkv
            pl.BlockSpec((1, DIM, QKV_DIM), lambda b, l: (l, 0, 0)),     # Wqkv pair-swapped
            pl.BlockSpec((1, Q_DIM, DIM), lambda b, l: (l, 0, 0)),       # Wo
            pl.BlockSpec((1, 1, DIM), lambda b, l: (l, 0, 0)),           # ffn RMSNorm w
            pl.BlockSpec((1, DIM, FFN_HIDDEN), lambda b, l: (l, 0, 0)),  # W1
            pl.BlockSpec((1, DIM, FFN_HIDDEN), lambda b, l: (l, 0, 0)),  # W3
            pl.BlockSpec((1, FFN_HIDDEN, DIM), lambda b, l: (l, 0, 0)),  # W2
            pl.BlockSpec((1, DIM), lambda b, l: (0, 0)),                 # final RMSNorm w
            pl.BlockSpec((DIM, VOCAB), lambda b, l: (0, 0)),             # LM head weight
        ],
        out_specs=pl.BlockSpec((1, S, VOCAB), lambda b, l: (b, 0, 0)),
        scratch_shapes=[pltpu.VMEM((S, DIM), jnp.float32)],              # residual carry
        compiler_params=pltpu.CompilerParams(
            dimension_semantics=("parallel", "arbitrary")),
    )(h, cosf, sinf, mask,
      params["attn_norm"], params["wqkv"], params["wqkv_swap"], params["wo"],
      params["ffn_norm"], params["w1"], params["w3"], params["w2"],
      params["norm_w"].reshape(1, -1), params["output_w"])
    return logits


# ---------------- Demo ---------------------------------------------------------
if __name__ == "__main__":
    key = jax.random.PRNGKey(0)
    params = init_params(key)

    tok_key = jax.random.fold_in(key, 123)
    tokens = jax.random.randint(tok_key, (2, 8), 0, VOCAB, dtype=jnp.int32)

    logits = transformer_forward(params, tokens, 0)
    jax.block_until_ready(logits)

    assert logits.shape == (2, 8, VOCAB)
    assert logits.dtype == jnp.float32
    assert bool(jnp.all(jnp.isfinite(logits)))
    print("KERNEL_OK")
</pallas_src>

<mosaic_0001>
module attributes {stable_mosaic.version = 11 : i64} {
  func.func @_transformer_kernel(%arg0: i32, %arg1: i32, %arg2: memref<1x8x32xf32, #tpu.memory_space<vmem>>, %arg3: memref<8x64xf32, #tpu.memory_space<vmem>>, %arg4: memref<8x64xf32, #tpu.memory_space<vmem>>, %arg5: memref<8x8xf32, #tpu.memory_space<vmem>>, %arg6: memref<1x1x32xf32, #tpu.memory_space<vmem>>, %arg7: memref<1x32x64xf32, #tpu.memory_space<vmem>>, %arg8: memref<1x32x64xf32, #tpu.memory_space<vmem>>, %arg9: memref<1x32x32xf32, #tpu.memory_space<vmem>>, %arg10: memref<1x1x32xf32, #tpu.memory_space<vmem>>, %arg11: memref<1x32x96xf32, #tpu.memory_space<vmem>>, %arg12: memref<1x32x96xf32, #tpu.memory_space<vmem>>, %arg13: memref<1x96x32xf32, #tpu.memory_space<vmem>>, %arg14: memref<1x32xf32, #tpu.memory_space<vmem>>, %arg15: memref<32x64xf32, #tpu.memory_space<vmem>>, %arg16: memref<1x8x64xf32, #tpu.memory_space<vmem>>, %arg17: memref<8x32xf32, #tpu.memory_space<vmem>>) attributes {dimension_semantics = [#tpu.dimension_semantics<parallel>, #tpu.dimension_semantics<arbitrary>], iteration_bounds = array<i64: 2, 2>, scalar_prefetch = 0 : i64, scratch_operands = 1 : i64, tpu.core_type = #tpu.core_type<tc>, window_params = [{transform_indices = @transform_0, window_bounds = array<i64: 1, 8, 32>}, {pipeline_mode = #tpu.pipeline_mode<synchronous>, transform_indices = @transform_1, window_bounds = array<i64: 8, 64>}, {pipeline_mode = #tpu.pipeline_mode<synchronous>, transform_indices = @transform_2, window_bounds = array<i64: 8, 64>}, {pipeline_mode = #tpu.pipeline_mode<synchronous>, transform_indices = @transform_3, window_bounds = array<i64: 8, 8>}, {transform_indices = @transform_4, window_bounds = array<i64: 1, 1, 32>}, {transform_indices = @transform_5, window_bounds = array<i64: 1, 32, 64>}, {transform_indices = @transform_6, window_bounds = array<i64: 1, 32, 64>}, {transform_indices = @transform_7, window_bounds = array<i64: 1, 32, 32>}, {transform_indices = @transform_8, window_bounds = array<i64: 1, 1, 32>}, {transform_indices = @transform_9, window_bounds = array<i64: 1, 32, 96>}, {transform_indices = @transform_10, window_bounds = array<i64: 1, 32, 96>}, {transform_indices = @transform_11, window_bounds = array<i64: 1, 96, 32>}, {pipeline_mode = #tpu.pipeline_mode<synchronous>, transform_indices = @transform_12, window_bounds = array<i64: 1, 32>}, {pipeline_mode = #tpu.pipeline_mode<synchronous>, transform_indices = @transform_13, window_bounds = array<i64: 32, 64>}, {transform_indices = @transform_14, window_bounds = array<i64: 1, 8, 64>}]} {
    %c0_i32 = arith.constant 0 : i32
    %0 = arith.cmpi eq, %arg1, %c0_i32 : i32
    %1 = arith.extui %0 : i1 to i32
    %c0_i32_0 = arith.constant 0 : i32
    %2 = arith.cmpi ne, %1, %c0_i32_0 : i32
    scf.if %2 {
      %c0_64 = arith.constant 0 : index
      %c0_65 = arith.constant 0 : index
      %c0_66 = arith.constant 0 : index
      %143 = vector.load %arg2[%c0_64, %c0_65, %c0_66] : memref<1x8x32xf32, #tpu.memory_space<vmem>>, vector<1x8x32xf32>
      %144 = vector.shape_cast %143 : vector<1x8x32xf32> to vector<8x32xf32>
      %c0_67 = arith.constant 0 : index
      %c0_68 = arith.constant 0 : index
      %145 = vector.load %arg17[%c0_67, %c0_68] : memref<8x32xf32, #tpu.memory_space<vmem>>, vector<8x32xf32>
      tpu.vector_store %arg17[%c0_67, %c0_68], %144 {strides = array<i32>} : memref<8x32xf32, #tpu.memory_space<vmem>>, vector<8x32xf32>,
    } else {
    }
    %c0 = arith.constant 0 : index
    %c0_1 = arith.constant 0 : index
    %3 = vector.load %arg17[%c0, %c0_1] : memref<8x32xf32, #tpu.memory_space<vmem>>, vector<8x32xf32>
    %4 = arith.mulf %3, %3 : vector<8x32xf32>
    %cst = arith.constant dense<0.000000e+00> : vector<8xf32>
    %5 = vector.multi_reduction <add>, %4, %cst [1] : vector<8x32xf32> to vector<8xf32>
    %6 = vector.shape_cast %5 : vector<8xf32> to vector<8x1xf32>
    %cst_2 = arith.constant 3.200000e+01 : f32
    %7 = vector.broadcast %cst_2 : f32 to vector<8x1xf32>
    %8 = arith.divf %6, %7 : vector<8x1xf32>
    %cst_3 = arith.constant 9.99999974E-6 : f32
    %9 = vector.broadcast %cst_3 : f32 to vector<8x1xf32>
    %10 = arith.addf %8, %9 : vector<8x1xf32>
    %11 = math.rsqrt %10 : vector<8x1xf32>
    %12 = vector.broadcast %11 : vector<8x1xf32> to vector<8x32xf32>
    %13 = arith.mulf %3, %12 : vector<8x32xf32>
    %c0_4 = arith.constant 0 : index
    %c0_5 = arith.constant 0 : index
    %c0_6 = arith.constant 0 : index
    %14 = vector.load %arg6[%c0_4, %c0_5, %c0_6] : memref<1x1x32xf32, #tpu.memory_space<vmem>>, vector<1x1x32xf32>
    %15 = vector.shape_cast %14 : vector<1x1x32xf32> to vector<1x32xf32>
    %16 = vector.broadcast %15 : vector<1x32xf32> to vector<8x32xf32>
    %17 = arith.mulf %13, %16 : vector<8x32xf32>
    %c0_7 = arith.constant 0 : index
    %c0_8 = arith.constant 0 : index
    %c0_9 = arith.constant 0 : index
    %18 = vector.load %arg7[%c0_7, %c0_8, %c0_9] : memref<1x32x64xf32, #tpu.memory_space<vmem>>, vector<1x32x64xf32>
    %19 = vector.shape_cast %18 : vector<1x32x64xf32> to vector<32x64xf32>
    %cst_10 = arith.constant dense<0.000000e+00> : vector<8x64xf32>
    %20 = tpu.matmul %17, %19, %cst_10 {dimension_numbers = #tpu.dot_dimension_numbers<[1], [0], [0], [1], [0, 0, 1, 1], [], []>} : vector<8x32xf32>, vector<32x64xf32>, vector<8x64xf32> -> vector<8x64xf32>
    %c0_11 = arith.constant 0 : index
    %c0_12 = arith.constant 0 : index
    %c0_13 = arith.constant 0 : index
    %21 = vector.load %arg8[%c0_11, %c0_12, %c0_13] : memref<1x32x64xf32, #tpu.memory_space<vmem>>, vector<1x32x64xf32>
    %22 = vector.shape_cast %21 : vector<1x32x64xf32> to vector<32x64xf32>
    %cst_14 = arith.constant dense<0.000000e+00> : vector<8x64xf32>
    %23 = tpu.matmul %17, %22, %cst_14 {dimension_numbers = #tpu.dot_dimension_numbers<[1], [0], [0], [1], [0, 0, 1, 1], [], []>} : vector<8x32xf32>, vector<32x64xf32>, vector<8x64xf32> -> vector<8x64xf32>
    %c0_15 = arith.constant 0 : index
    %c0_16 = arith.constant 0 : index
    %24 = vector.load %arg3[%c0_15, %c0_16] : memref<8x64xf32, #tpu.memory_space<vmem>>, vector<8x64xf32>
    %25 = arith.mulf %20, %24 : vector<8x64xf32>
    %c0_17 = arith.constant 0 : index
    %c0_18 = arith.constant 0 : index
    %26 = vector.load %arg4[%c0_17, %c0_18] : memref<8x64xf32, #tpu.memory_space<vmem>>, vector<8x64xf32>
    %27 = arith.mulf %23, %26 : vector<8x64xf32>
    %28 = arith.addf %25, %27 : vector<8x64xf32>
    %29 = vector.extract_strided_slice %28 {offsets = [0, 0], sizes = [8, 32], strides = [1, 1]} : vector<8x64xf32> to vector<8x32xf32>
    %cst_19 = arith.constant 0.353553385 : f32
    %30 = vector.broadcast %cst_19 : f32 to vector<8x32xf32>
    %31 = arith.mulf %29, %30 : vector<8x32xf32>
    %32 = vector.extract_strided_slice %28 {offsets = [0, 32], sizes = [8, 16], strides = [1, 1]} : vector<8x64xf32> to vector<8x16xf32>
    %33 = vector.extract_strided_slice %28 {offsets = [0, 48], sizes = [8, 16], strides = [1, 1]} : vector<8x64xf32> to vector<8x16xf32>
    %c0_20 = arith.constant 0 : index
    %c0_21 = arith.constant 0 : index
    %34 = vector.load %arg5[%c0_20, %c0_21] : memref<8x8xf32, #tpu.memory_space<vmem>>, vector<8x8xf32>
    %35 = vector.extract_strided_slice %31 {offsets = [0, 0], sizes = [8, 8], strides = [1, 1]} : vector<8x32xf32> to vector<8x8xf32>
    %36 = vector.extract_strided_slice %32 {offsets = [0, 0], sizes = [8, 8], strides = [1, 1]} : vector<8x16xf32> to vector<8x8xf32>
    %37 = vector.extract_strided_slice %33 {offsets = [0, 0], sizes = [8, 8], strides = [1, 1]} : vector<8x16xf32> to vector<8x8xf32>
    %38 = tpu.transpose %36, [1, 0] : vector<8x8xf32> -> vector<8x8xf32>
    %cst_22 = arith.constant dense<0.000000e+00> : vector<8x8xf32>
    %39 = tpu.matmul %35, %38, %cst_22 {dimension_numbers = #tpu.dot_dimension_numbers<[1], [0], [0], [1], [0, 0, 1, 1], [], []>} : vector<8x8xf32>, vector<8x8xf32>, vector<8x8xf32> -> vector<8x8xf32>
    %40 = arith.addf %39, %34 : vector<8x8xf32>
    %cst_23 = arith.constant dense<0xFF800000> : vector<8xf32>
    %41 = vector.multi_reduction <maximumf>, %40, %cst_23 [1] : vector<8x8xf32> to vector<8xf32>
    %42 = vector.shape_cast %41 : vector<8xf32> to vector<8x1xf32>
    %43 = vector.broadcast %42 : vector<8x1xf32> to vector<8x8xf32>
    %44 = arith.subf %40, %43 : vector<8x8xf32>
    %45 = math.exp %44 : vector<8x8xf32>
    %cst_24 = arith.constant dense<0.000000e+00> : vector<8xf32>
    %46 = vector.multi_reduction <add>, %45, %cst_24 [1] : vector<8x8xf32> to vector<8xf32>
    %47 = vector.shape_cast %46 : vector<8xf32> to vector<8x1xf32>
    %48 = tpu.reciprocal %47 {approx = true} : vector<8x1xf32> -> vector<8x1xf32>
    %49 = vector.broadcast %48 : vector<8x1xf32> to vector<8x8xf32>
    %50 = arith.mulf %45, %49 : vector<8x8xf32>
    %cst_25 = arith.constant dense<0.000000e+00> : vector<8x8xf32>
    %51 = tpu.matmul %50, %37, %cst_25 {dimension_numbers = #tpu.dot_dimension_numbers<[1], [0], [0], [1], [0, 0, 1, 1], [], []>} : vector<8x8xf32>, vector<8x8xf32>, vector<8x8xf32> -> vector<8x8xf32>
    %52 = vector.extract_strided_slice %31 {offsets = [0, 8], sizes = [8, 8], strides = [1, 1]} : vector<8x32xf32> to vector<8x8xf32>
    %53 = vector.extract_strided_slice %32 {offsets = [0, 0], sizes = [8, 8], strides = [1, 1]} : vector<8x16xf32> to vector<8x8xf32>
    %54 = vector.extract_strided_slice %33 {offsets = [0, 0], sizes = [8, 8], strides = [1, 1]} : vector<8x16xf32> to vector<8x8xf32>
    %55 = tpu.transpose %53, [1, 0] : vector<8x8xf32> -> vector<8x8xf32>
    %cst_26 = arith.constant dense<0.000000e+00> : vector<8x8xf32>
    %56 = tpu.matmul %52, %55, %cst_26 {dimension_numbers = #tpu.dot_dimension_numbers<[1], [0], [0], [1], [0, 0, 1, 1], [], []>} : vector<8x8xf32>, vector<8x8xf32>, vector<8x8xf32> -> vector<8x8xf32>
    %57 = arith.addf %56, %34 : vector<8x8xf32>
    %cst_27 = arith.constant dense<0xFF800000> : vector<8xf32>
    %58 = vector.multi_reduction <maximumf>, %57, %cst_27 [1] : vector<8x8xf32> to vector<8xf32>
    %59 = vector.shape_cast %58 : vector<8xf32> to vector<8x1xf32>
    %60 = vector.broadcast %59 : vector<8x1xf32> to vector<8x8xf32>
    %61 = arith.subf %57, %60 : vector<8x8xf32>
    %62 = math.exp %61 : vector<8x8xf32>
    %cst_28 = arith.constant dense<0.000000e+00> : vector<8xf32>
    %63 = vector.multi_reduction <add>, %62, %cst_28 [1] : vector<8x8xf32> to vector<8xf32>
    %64 = vector.shape_cast %63 : vector<8xf32> to vector<8x1xf32>
    %65 = tpu.reciprocal %64 {approx = true} : vector<8x1xf32> -> vector<8x1xf32>
    %66 = vector.broadcast %65 : vector<8x1xf32> to vector<8x8xf32>
    %67 = arith.mulf %62, %66 : vector<8x8xf32>
    %cst_29 = arith.constant dense<0.000000e+00> : vector<8x8xf32>
    %68 = tpu.matmul %67, %54, %cst_29 {dimension_numbers = #tpu.dot_dimension_numbers<[1], [0], [0], [1], [0, 0, 1, 1], [], []>} : vector<8x8xf32>, vector<8x8xf32>, vector<8x8xf32> -> vector<8x8xf32>
    %69 = vector.extract_strided_slice %31 {offsets = [0, 16], sizes = [8, 8], strides = [1, 1]} : vector<8x32xf32> to vector<8x8xf32>
    %70 = vector.extract_strided_slice %32 {offsets = [0, 8], sizes = [8, 8], strides = [1, 1]} : vector<8x16xf32> to vector<8x8xf32>
    %71 = vector.extract_strided_slice %33 {offsets = [0, 8], sizes = [8, 8], strides = [1, 1]} : vector<8x16xf32> to vector<8x8xf32>
    %72 = tpu.transpose %70, [1, 0] : vector<8x8xf32> -> vector<8x8xf32>
    %cst_30 = arith.constant dense<0.000000e+00> : vector<8x8xf32>
    %73 = tpu.matmul %69, %72, %cst_30 {dimension_numbers = #tpu.dot_dimension_numbers<[1], [0], [0], [1], [0, 0, 1, 1], [], []>} : vector<8x8xf32>, vector<8x8xf32>, vector<8x8xf32> -> vector<8x8xf32>
    %74 = arith.addf %73, %34 : vector<8x8xf32>
    %cst_31 = arith.constant dense<0xFF800000> : vector<8xf32>
    %75 = vector.multi_reduction <maximumf>, %74, %cst_31 [1] : vector<8x8xf32> to vector<8xf32>
    %76 = vector.shape_cast %75 : vector<8xf32> to vector<8x1xf32>
    %77 = vector.broadcast %76 : vector<8x1xf32> to vector<8x8xf32>
    %78 = arith.subf %74, %77 : vector<8x8xf32>
    %79 = math.exp %78 : vector<8x8xf32>
    %cst_32 = arith.constant dense<0.000000e+00> : vector<8xf32>
    %80 = vector.multi_reduction <add>, %79, %cst_32 [1] : vector<8x8xf32> to vector<8xf32>
    %81 = vector.shape_cast %80 : vector<8xf32> to vector<8x1xf32>
    %82 = tpu.reciprocal %81 {approx = true} : vector<8x1xf32> -> vector<8x1xf32>
    %83 = vector.broadcast %82 : vector<8x1xf32> to vector<8x8xf32>
    %84 = arith.mulf %79, %83 : vector<8x8xf32>
    %cst_33 = arith.constant dense<0.000000e+00> : vector<8x8xf32>
    %85 = tpu.matmul %84, %71, %cst_33 {dimension_numbers = #tpu.dot_dimension_numbers<[1], [0], [0], [1], [0, 0, 1, 1], [], []>} : vector<8x8xf32>, vector<8x8xf32>, vector<8x8xf32> -> vector<8x8xf32>
    %86 = vector.extract_strided_slice %31 {offsets = [0, 24], sizes = [8, 8], strides = [1, 1]} : vector<8x32xf32> to vector<8x8xf32>
    %87 = vector.extract_strided_slice %32 {offsets = [0, 8], sizes = [8, 8], strides = [1, 1]} : vector<8x16xf32> to vector<8x8xf32>
    %88 = vector.extract_strided_slice %33 {offsets = [0, 8], sizes = [8, 8], strides = [1, 1]} : vector<8x16xf32> to vector<8x8xf32>
    %89 = tpu.transpose %87, [1, 0] : vector<8x8xf32> -> vector<8x8xf32>
    %cst_34 = arith.constant dense<0.000000e+00> : vector<8x8xf32>
    %90 = tpu.matmul %86, %89, %cst_34 {dimension_numbers = #tpu.dot_dimension_numbers<[1], [0], [0], [1], [0, 0, 1, 1], [], []>} : vector<8x8xf32>, vector<8x8xf32>, vector<8x8xf32> -> vector<8x8xf32>
    %91 = arith.addf %90, %34 : vector<8x8xf32>
    %cst_35 = arith.constant dense<0xFF800000> : vector<8xf32>
    %92 = vector.multi_reduction <maximumf>, %91, %cst_35 [1] : vector<8x8xf32> to vector<8xf32>
    %93 = vector.shape_cast %92 : vector<8xf32> to vector<8x1xf32>
    %94 = vector.broadcast %93 : vector<8x1xf32> to vector<8x8xf32>
    %95 = arith.subf %91, %94 : vector<8x8xf32>
    %96 = math.exp %95 : vector<8x8xf32>
    %cst_36 = arith.constant dense<0.000000e+00> : vector<8xf32>
    %97 = vector.multi_reduction <add>, %96, %cst_36 [1] : vector<8x8xf32> to vector<8xf32>
    %98 = vector.shape_cast %97 : vector<8xf32> to vector<8x1xf32>
    %99 = tpu.reciprocal %98 {approx = true} : vector<8x1xf32> -> vector<8x1xf32>
    %100 = vector.broadcast %99 : vector<8x1xf32> to vector<8x8xf32>
    %101 = arith.mulf %96, %100 : vector<8x8xf32>
    %cst_37 = arith.constant dense<0.000000e+00> : vector<8x8xf32>
    %102 = tpu.matmul %101, %88, %cst_37 {dimension_numbers = #tpu.dot_dimension_numbers<[1], [0], [0], [1], [0, 0, 1, 1], [], []>} : vector<8x8xf32>, vector<8x8xf32>, vector<8x8xf32> -> vector<8x8xf32>
    %103 = tpu.concatenate %51, %68, %85, %102 in 1 : vector<8x8xf32>, vector<8x8xf32>, vector<8x8xf32>, vector<8x8xf32> -> vector<8x32xf32>
    %c0_38 = arith.constant 0 : index
    %c0_39 = arith.constant 0 : index
    %c0_40 = arith.constant 0 : index
    %104 = vector.load %arg9[%c0_38, %c0_39, %c0_40] : memref<1x32x32xf32, #tpu.memory_space<vmem>>, vector<1x32x32xf32>
    %105 = vector.shape_cast %104 : vector<1x32x32xf32> to vector<32x32xf32>
    %cst_41 = arith.constant dense<0.000000e+00> : vector<8x32xf32>
    %106 = tpu.matmul %103, %105, %cst_41 {dimension_numbers = #tpu.dot_dimension_numbers<[1], [0], [0], [1], [0, 0, 1, 1], [], []>} : vector<8x32xf32>, vector<32x32xf32>, vector<8x32xf32> -> vector<8x32xf32>
    %107 = arith.addf %3, %106 : vector<8x32xf32>
    %108 = arith.mulf %107, %107 : vector<8x32xf32>
    %cst_42 = arith.constant dense<0.000000e+00> : vector<8xf32>
    %109 = vector.multi_reduction <add>, %108, %cst_42 [1] : vector<8x32xf32> to vector<8xf32>
    %110 = vector.shape_cast %109 : vector<8xf32> to vector<8x1xf32>
    %cst_43 = arith.constant 3.200000e+01 : f32
    %111 = vector.broadcast %cst_43 : f32 to vector<8x1xf32>
    %112 = arith.divf %110, %111 : vector<8x1xf32>
    %cst_44 = arith.constant 9.99999974E-6 : f32
    %113 = vector.broadcast %cst_44 : f32 to vector<8x1xf32>
    %114 = arith.addf %112, %113 : vector<8x1xf32>
    %115 = math.rsqrt %114 : vector<8x1xf32>
    %116 = vector.broadcast %115 : vector<8x1xf32> to vector<8x32xf32>
    %117 = arith.mulf %107, %116 : vector<8x32xf32>
    %c0_45 = arith.constant 0 : index
    %c0_46 = arith.constant 0 : index
    %c0_47 = arith.constant 0 : index
    %118 = vector.load %arg10[%c0_45, %c0_46, %c0_47] : memref<1x1x32xf32, #tpu.memory_space<vmem>>, vector<1x1x32xf32>
    %119 = vector.shape_cast %118 : vector<1x1x32xf32> to vector<1x32xf32>
    %120 = vector.broadcast %119 : vector<1x32xf32> to vector<8x32xf32>
    %121 = arith.mulf %117, %120 : vector<8x32xf32>
    %c0_48 = arith.constant 0 : index
    %c0_49 = arith.constant 0 : index
    %c0_50 = arith.constant 0 : index
    %122 = vector.load %arg11[%c0_48, %c0_49, %c0_50] : memref<1x32x96xf32, #tpu.memory_space<vmem>>, vector<1x32x96xf32>
    %123 = vector.shape_cast %122 : vector<1x32x96xf32> to vector<32x96xf32>
    %cst_51 = arith.constant dense<0.000000e+00> : vector<8x96xf32>
    %124 = tpu.matmul %121, %123, %cst_51 {dimension_numbers = #tpu.dot_dimension_numbers<[1], [0], [0], [1], [0, 0, 1, 1], [], []>} : vector<8x32xf32>, vector<32x96xf32>, vector<8x96xf32> -> vector<8x96xf32>
    %c0_52 = arith.constant 0 : index
    %c0_53 = arith.constant 0 : index
    %c0_54 = arith.constant 0 : index
    %125 = vector.load %arg12[%c0_52, %c0_53, %c0_54] : memref<1x32x96xf32, #tpu.memory_space<vmem>>, vector<1x32x96xf32>
    %126 = vector.shape_cast %125 : vector<1x32x96xf32> to vector<32x96xf32>
    %cst_55 = arith.constant dense<0.000000e+00> : vector<8x96xf32>
    %127 = tpu.matmul %121, %126, %cst_55 {dimension_numbers = #tpu.dot_dimension_numbers<[1], [0], [0], [1], [0, 0, 1, 1], [], []>} : vector<8x32xf32>, vector<32x96xf32>, vector<8x96xf32> -> vector<8x96xf32>
    %128 = arith.negf %124 : vector<8x96xf32>
    %129 = math.exp %128 : vector<8x96xf32>
    %cst_56 = arith.constant 1.000000e+00 : f32
    %130 = vector.broadcast %cst_56 : f32 to vector<8x96xf32>
    %131 = arith.addf %130, %129 : vector<8x96xf32>
    %132 = arith.divf %130, %131 : vector<8x96xf32>
    %133 = arith.mulf %124, %132 : vector<8x96xf32>
    %134 = arith.mulf %133, %127 : vector<8x96xf32>
    %c0_57 = arith.constant 0 : index
    %c0_58 = arith.constant 0 : index
    %c0_59 = arith.constant 0 : index
    %135 = vector.load %arg13[%c0_57, %c0_58, %c0_59] : memref<1x96x32xf32, #tpu.memory_space<vmem>>, vector<1x96x32xf32>
    %136 = vector.shape_cast %135 : vector<1x96x32xf32> to vector<96x32xf32>
    %cst_60 = arith.constant dense<0.000000e+00> : vector<8x32xf32>
    %137 = tpu.matmul %134, %136, %cst_60 {dimension_numbers = #tpu.dot_dimension_numbers<[1], [0], [0], [1], [0, 0, 1, 1], [], []>} : vector<8x96xf32>, vector<96x32xf32>, vector<8x32xf32> -> vector<8x32xf32>
    %138 = arith.addf %107, %137 : vector<8x32xf32>
    %c0_61 = arith.constant 0 : index
    %c0_62 = arith.constant 0 : index
    %139 = vector.load %arg17[%c0_61, %c0_62] : memref<8x32xf32, #tpu.memory_space<vmem>>, vector<8x32xf32>
    tpu.vector_store %arg17[%c0_61, %c0_62], %138 {strides = array<i32>} : memref<8x32xf32, #tpu.memory_space<vmem>>, vector<8x32xf32>,
    %c1_i32 = arith.constant 1 : i32
    %140 = arith.cmpi eq, %arg1, %c1_i32 : i32
    %141 = arith.extui %140 : i1 to i32
    %c0_i32_63 = arith.constant 0 : i32
    %142 = arith.cmpi ne, %141, %c0_i32_63 : i32
    scf.if %142 {
      %143 = arith.mulf %138, %138 : vector<8x32xf32>
      %cst_64 = arith.constant dense<0.000000e+00> : vector<8xf32>
      %144 = vector.multi_reduction <add>, %143, %cst_64 [1] : vector<8x32xf32> to vector<8xf32>
      %145 = vector.shape_cast %144 : vector<8xf32> to vector<8x1xf32>
      %cst_65 = arith.constant 3.200000e+01 : f32
      %146 = vector.broadcast %cst_65 : f32 to vector<8x1xf32>
      %147 = arith.divf %145, %146 : vector<8x1xf32>
      %cst_66 = arith.constant 9.99999974E-6 : f32
      %148 = vector.broadcast %cst_66 : f32 to vector<8x1xf32>
      %149 = arith.addf %147, %148 : vector<8x1xf32>
      %150 = math.rsqrt %149 : vector<8x1xf32>
      %151 = vector.broadcast %150 : vector<8x1xf32> to vector<8x32xf32>
      %152 = arith.mulf %138, %151 : vector<8x32xf32>
      %c0_67 = arith.constant 0 : index
      %c0_68 = arith.constant 0 : index
      %153 = vector.load %arg14[%c0_67, %c0_68] : memref<1x32xf32, #tpu.memory_space<vmem>>, vector<1x32xf32>
      %154 = vector.broadcast %153 : vector<1x32xf32> to vector<8x32xf32>
      %155 = arith.mulf %152, %154 : vector<8x32xf32>
      %c0_69 = arith.constant 0 : index
      %c0_70 = arith.constant 0 : index
      %156 = vector.load %arg15[%c0_69, %c0_70] : memref<32x64xf32, #tpu.memory_space<vmem>>, vector<32x64xf32>
      %cst_71 = arith.constant dense<0.000000e+00> : vector<8x64xf32>
      %157 = tpu.matmul %155, %156, %cst_71 {dimension_numbers = #tpu.dot_dimension_numbers<[1], [0], [0], [1], [0, 0, 1, 1], [], []>} : vector<8x32xf32>, vector<32x64xf32>, vector<8x64xf32> -> vector<8x64xf32>
      %c0_72 = arith.constant 0 : index
      %c0_73 = arith.constant 0 : index
      %c0_74 = arith.constant 0 : index
      %158 = vector.load %arg16[%c0_72, %c0_73, %c0_74] : memref<1x8x64xf32, #tpu.memory_space<vmem>>, vector<1x8x64xf32>
      %159 = vector.shape_cast %158 : vector<1x8x64xf32> to vector<8x64xf32>
      %160 = vector.shape_cast %157 : vector<8x64xf32> to vector<1x8x64xf32>
      tpu.vector_store %arg16[%c0_72, %c0_73, %c0_74], %160 {strides = array<i32>} : memref<1x8x64xf32, #tpu.memory_space<vmem>>, vector<1x8x64xf32>,
    } else {
    }
    return
  }
  func.func @transform_0(%arg0: i32, %arg1: i32) -> (i32, i32, i32) {
    %c0_i32 = arith.constant 0 : i32
    %c0_i32_0 = arith.constant 0 : i32
    %c0_i32_1 = arith.constant 0 : i32
    return %arg0, %c0_i32, %c0_i32_0 : i32, i32, i32
  }
  func.func @transform_1(%arg0: i32, %arg1: i32) -> (i32, i32) {
    %c0_i32 = arith.constant 0 : i32
    %c0_i32_0 = arith.constant 0 : i32
    %c0_i32_1 = arith.constant 0 : i32
    return %c0_i32, %c0_i32_0 : i32, i32
  }
  func.func @transform_2(%arg0: i32, %arg1: i32) -> (i32, i32) {
    %c0_i32 = arith.constant 0 : i32
    %c0_i32_0 = arith.constant 0 : i32
    %c0_i32_1 = arith.constant 0 : i32
    return %c0_i32, %c0_i32_0 : i32, i32
  }
  func.func @transform_3(%arg0: i32, %arg1: i32) -> (i32, i32) {
    %c0_i32 = arith.constant 0 : i32
    %c0_i32_0 = arith.constant 0 : i32
    %c0_i32_1 = arith.constant 0 : i32
    return %c0_i32, %c0_i32_0 : i32, i32
  }
  func.func @transform_4(%arg0: i32, %arg1: i32) -> (i32, i32, i32) {
    %c0_i32 = arith.constant 0 : i32
    %c0_i32_0 = arith.constant 0 : i32
    %c0_i32_1 = arith.constant 0 : i32
    return %arg1, %c0_i32, %c0_i32_0 : i32, i32, i32
  }
  func.func @transform_5(%arg0: i32, %arg1: i32) -> (i32, i32, i32) {
    %c0_i32 = arith.constant 0 : i32
    %c0_i32_0 = arith.constant 0 : i32
    %c0_i32_1 = arith.constant 0 : i32
    return %arg1, %c0_i32, %c0_i32_0 : i32, i32, i32
  }
  func.func @transform_6(%arg0: i32, %arg1: i32) -> (i32, i32, i32) {
    %c0_i32 = arith.constant 0 : i32
    %c0_i32_0 = arith.constant 0 : i32
    %c0_i32_1 = arith.constant 0 : i32
    return %arg1, %c0_i32, %c0_i32_0 : i32, i32, i32
  }
  func.func @transform_7(%arg0: i32, %arg1: i32) -> (i32, i32, i32) {
    %c0_i32 = arith.constant 0 : i32
    %c0_i32_0 = arith.constant 0 : i32
    %c0_i32_1 = arith.constant 0 : i32
    return %arg1, %c0_i32, %c0_i32_0 : i32, i32, i32
  }
  func.func @transform_8(%arg0: i32, %arg1: i32) -> (i32, i32, i32) {
    %c0_i32 = arith.constant 0 : i32
    %c0_i32_0 = arith.constant 0 : i32
    %c0_i32_1 = arith.constant 0 : i32
    return %arg1, %c0_i32, %c0_i32_0 : i32, i32, i32
  }
  func.func @transform_9(%arg0: i32, %arg1: i32) -> (i32, i32, i32) {
    %c0_i32 = arith.constant 0 : i32
    %c0_i32_0 = arith.constant 0 : i32
    %c0_i32_1 = arith.constant 0 : i32
    return %arg1, %c0_i32, %c0_i32_0 : i32, i32, i32
  }
  func.func @transform_10(%arg0: i32, %arg1: i32) -> (i32, i32, i32) {
    %c0_i32 = arith.constant 0 : i32
    %c0_i32_0 = arith.constant 0 : i32
    %c0_i32_1 = arith.constant 0 : i32
    return %arg1, %c0_i32, %c0_i32_0 : i32, i32, i32
  }
  func.func @transform_11(%arg0: i32, %arg1: i32) -> (i32, i32, i32) {
    %c0_i32 = arith.constant 0 : i32
    %c0_i32_0 = arith.constant 0 : i32
    %c0_i32_1 = arith.constant 0 : i32
    return %arg1, %c0_i32, %c0_i32_0 : i32, i32, i32
  }
  func.func @transform_12(%arg0: i32, %arg1: i32) -> (i32, i32) {
    %c0_i32 = arith.constant 0 : i32
    %c0_i32_0 = arith.constant 0 : i32
    %c0_i32_1 = arith.constant 0 : i32
    return %c0_i32, %c0_i32_0 : i32, i32
  }
  func.func @transform_13(%arg0: i32, %arg1: i32) -> (i32, i32) {
    %c0_i32 = arith.constant 0 : i32
    %c0_i32_0 = arith.constant 0 : i32
    %c0_i32_1 = arith.constant 0 : i32
    return %c0_i32, %c0_i32_0 : i32, i32
  }
  func.func @transform_14(%arg0: i32, %arg1: i32) -> (i32, i32, i32) {
    %c0_i32 = arith.constant 0 : i32
    %c0_i32_0 = arith.constant 0 : i32
    %c0_i32_1 = arith.constant 0 : i32
    return %arg0, %c0_i32, %c0_i32_0 : i32, i32, i32
  }
}

</mosaic_0001>

<llo_original>
// kernel: tile.15
$region0: #{tile.15}
  %s0 = inlined_call_operand.vmem [shape: f32[8,6,8], index: 0, kind: input, shape index: {}]
  %s1 = inlined_call_operand.vmem [shape: f32[8,48], index: 1, kind: output, shape index: {}]
  %v2 = vld [vmem:[%s0] ss:$8 sm:$0xf]
  %v3 = vld [vmem:[%s0] ss:$8 sm:$0xf0]
  %vm4 = vcmask 1047556
  %v5 = vsel %vm4, %v3, %v2
  %vm6 = vcmask 64512
  %7 = vst.msk [vmem:[%s1] sm:$0xff] %vm6, %v5
  %s8 = scalar_lea.vmem %s0, 5
  %v9 = vld [vmem:[%s8] ss:$8 sm:$0xf]
  %s10 = scalar_lea.vmem %s0, 5
  %v11 = vld [vmem:[%s10] ss:$8 sm:$0xf0]
  %vm12 = vcmask 1047556
  %v13 = vsel %vm12, %v11, %v9
  %14 = vrot.lane.b32.xlu0 %v13, 40
  %v15 = vpop.permute.xlu0 %14
  %vm16 = vcmask 392512
  %17 = vst.msk [vmem:[%s1] sm:$0xff] %vm16, %v15
  %s18 = scalar_lea.vmem %s0, 4
  %v19 = vld [vmem:[%s18] ss:$8 sm:$0xf]
  %s20 = scalar_lea.vmem %s0, 4
  %v21 = vld [vmem:[%s20] ss:$8 sm:$0xf0]
  %vm22 = vcmask 1047556
  %v23 = vsel %vm22, %v21, %v19
  %24 = vrot.lane.b32.xlu0 %v23, 32
  %v25 = vpop.permute.xlu0 %24
  %vm26 = vcmask 326912
  %27 = vst.msk [vmem:[%s1] sm:$0xff] %vm26, %v25
  %s28 = scalar_lea.vmem %s0, 3
  %v29 = vld [vmem:[%s28] ss:$8 sm:$0xf]
  %s30 = scalar_lea.vmem %s0, 3
  %v31 = vld [vmem:[%s30] ss:$8 sm:$0xf0]
  %vm32 = vcmask 1047556
  %v33 = vsel %vm32, %v31, %v29
  %34 = vrot.lane.b32.xlu0 %v33, 24
  %v35 = vpop.permute.xlu0 %34
  %vm36 = vcmask 261312
  %37 = vst.msk [vmem:[%s1] sm:$0xff] %vm36, %v35
  %s38 = scalar_lea.vmem %s0, 2
  %v39 = vld [vmem:[%s38] ss:$8 sm:$0xf]
  %s40 = scalar_lea.vmem %s0, 2
  %v41 = vld [vmem:[%s40] ss:$8 sm:$0xf0]
  %vm42 = vcmask 1047556
  %v43 = vsel %vm42, %v41, %v39
  %44 = vrot.lane.b32.xlu0 %v43, 16
  %v45 = vpop.permute.xlu0 %44
  %vm46 = vcmask 195712
  %47 = vst.msk [vmem:[%s1] sm:$0xff] %vm46, %v45
  %s48 = scalar_lea.vmem %s0, 1
  %v49 = vld [vmem:[%s48] ss:$8 sm:$0xf]
  %s50 = scalar_lea.vmem %s0, 1
  %v51 = vld [vmem:[%s50] ss:$8 sm:$0xf0]
  %vm52 = vcmask 1047556
  %v53 = vsel %vm52, %v51, %v49
  %54 = vrot.lane.b32.xlu0 %v53, 8
  %v55 = vpop.permute.xlu0 %54
  %vm56 = vcmask 130112
  %57 = vst.msk [vmem:[%s1] sm:$0xff] %vm56, %v55

// kernel: transformer_forward.1
$region0: #{transformer_forward.1}
  #allocation0 [shape = 'u32[]', space=smem, size = 0x4, offset = 0x4, fixed_abs, tag = 'smem constant byte address 0x4 - core index']
  #allocation1 [shape = 'u32[144,128]{1,0:T(1,128)}', space=vmem, size = 0x12000, scoped, tag = 'internal scratch']
  #allocation2 [shape = 'f32[8,32]{1,0:T(8,128)}', space=vmem, size = 0x1000, scoped, tag = 'scratch operand']
  %s0 = inlined_call_operand.vmem [shape: f32[2,8,32], index: 0, kind: input, shape index: {}]
  %s1 = inlined_call_operand.vmem [shape: f32[8,64], index: 1, kind: input, shape index: {}]
  %s2 = inlined_call_operand.vmem [shape: f32[8,64], index: 2, kind: input, shape index: {}]
  %s3 = inlined_call_operand.vmem [shape: f32[8,8], index: 3, kind: input, shape index: {}]
  %s4 = inlined_call_operand.vmem [shape: f32[2,1,32], index: 4, kind: input, shape index: {}]
  %s5 = inlined_call_operand.vmem [shape: f32[2,32,64], index: 5, kind: input, shape index: {}]
  %s6 = inlined_call_operand.vmem [shape: f32[2,32,64], index: 6, kind: input, shape index: {}]
  %s7 = inlined_call_operand.vmem [shape: f32[2,32,32], index: 7, kind: input, shape index: {}]
  %s8 = inlined_call_operand.vmem [shape: f32[2,1,32], index: 8, kind: input, shape index: {}]
  %s9 = inlined_call_operand.vmem [shape: f32[2,32,96], index: 9, kind: input, shape index: {}]
  %s10 = inlined_call_operand.vmem [shape: f32[2,32,96], index: 10, kind: input, shape index: {}]
  %s11 = inlined_call_operand.vmem [shape: f32[2,96,32], index: 11, kind: input, shape index: {}]
  %s12 = inlined_call_operand.vmem [shape: f32[1,32], index: 12, kind: input, shape index: {}]
  %s13 = inlined_call_operand.vmem [shape: f32[32,64], index: 13, kind: input, shape index: {}]
  %s14 = inlined_call_operand.hbm [shape: f32[2,8,64], index: 14, kind: output, shape index: {}]
  %s15 = sld [smem:[#allocation0]]
  $region97: #{transformer_forward.1} parent=0
    _
  %s17 = ssub.s32 1, %s15
  %s18 = scalar_select 0, %s17, %s15
  $region1: #{transformer_forward.1} parent=0
    #allocation3 [shape = 'u8[8192]{0}', space=vmem, size = 0x2000, scoped, tag = 'output window, operand 0']
    #allocation4 [shape = 's32[2]{0}', space=sflag, size = 0x8, scoped, tag = 'scoped memory for transformer_forward.1']
    %19 = vsyncpa [#allocation4], 0
    %s20 = scalar_lea.sflag [#allocation4], 1
    %21 = vsyncpa %s20, 0
    loop: start=0, step=1, limit=6
    $region2: #{transformer_forward.1} parent=1 // loop_pre_header
      _
    $region3: #{transformer_forward.1} parent=1 // loop_header
      %s23 = sphi 0, %s27
      %p24 = scmp.ge.s32.totalorder %s23, 6
      %s30 = sphi 0, %s42
      %s31 = sphi 0, %s38
      %s32 = sphi 0, %s30
      %s33 = sphi 0, %s31
      %s34 = sphi 0, %s32
      %s35 = sphi 0, %s33
      %s45 = sphi 0, %s47
      %s48 = sphi 0, %s45
      %s49 = sphi 0, %s48
      %s65 = sphi 0, %s49
      %s69 = sphi 0, %s69
      %s71 = sphi 0, %s69
      %s72 = sphi 0, %s71
      %s86 = sphi 0, %s72
      %s90 = sphi 0, %s90
      %s92 = sphi 0, %s90
      %s93 = sphi 0, %s92
      %s107 = sphi 0, %s93
      %s111 = sphi 0, %s111
      %s113 = sphi 0, %s111
      %s114 = sphi 0, %s113
      %s128 = sphi 0, %s114
      %s134 = sphi 0, %s136
      %s137 = sphi 0, %s134
      %s138 = sphi 0, %s137
      %s154 = sphi 0, %s138
      %s160 = sphi 0, %s162
      %s163 = sphi 0, %s160
      %s164 = sphi 0, %s163
      %s180 = sphi 0, %s164
      %s186 = sphi 0, %s188
      %s189 = sphi 0, %s186
      %s190 = sphi 0, %s189
      %s206 = sphi 0, %s190
      %s212 = sphi 0, %s214
      %s215 = sphi 0, %s212
      %s216 = sphi 0, %s215
      %s232 = sphi 0, %s216
      %s238 = sphi 0, %s240
      %s241 = sphi 0, %s238
      %s242 = sphi 0, %s241
      %s258 = sphi 0, %s242
      %s264 = sphi 0, %s266
      %s267 = sphi 0, %s264
      %s268 = sphi 0, %s267
      %s284 = sphi 0, %s268
      %s290 = sphi 0, %s292
      %s293 = sphi 0, %s290
      %s294 = sphi 0, %s293
      %s310 = sphi 0, %s294
      %s316 = sphi 0, %s318
      %s319 = sphi 0, %s316
      %s320 = sphi 0, %s319
      %s336 = sphi 0, %s320
      %s340 = sphi 0, %s340
      %s342 = sphi 0, %s340
      %s343 = sphi 0, %s342
      %s357 = sphi 0, %s343
      %s361 = sphi 0, %s361
      %s363 = sphi 0, %s361
      %s364 = sphi 0, %s363
      %s378 = sphi 0, %s364
      %s384 = sphi 0, %s386
      %s387 = sphi 0, %s384
      %s388 = sphi 0, %s387
      %s404 = sphi 0, %s388
    $region4: #{transformer_forward.1} parent=1 // loop_header_branch
      %26 = sbr.rel (%p24) target = $region8
    $region5: #{transformer_forward.1} parent=1 // loop_body
      %s28 = ssub.s32 %s23, 1
      %s29 = ssub.s32 %s23, 2
      %s36 = sadd.s32 1, %s31
      %p37 = scmp.ge.s32.totalorder %s36, 2
      %s38 = scalar_select %p37, 0, %s36
      %s39 = sadd.s32 1, %s30
      %s40 = scalar_select %p37, %s39, %s30
      %p41 = scmp.ge.s32.totalorder %s40, 2
      %s42 = scalar_select %p41, 0, %s40
      %s43 = ssub.s32 %s30, %s42
      %p44 = scmp.eq.s32.totalorder %s43, 0
      %s46 = sadd.s32 %s45, 1
      %s47 = scalar_select %p44, %s45, %s46
      %p50 = pneg %p44
      %p51 = scmp.eq.s32.totalorder %s23, 3
      %p52 = por %p50, %p51
      %p53 = scmp.ne.s32.totalorder %s45, %s48
      %p54 = scmp.eq.s32.totalorder %s23, 0
      %p55 = por %p53, %p54
      %p56 = scmp.ne.s32.totalorder %s45, %s48
      %p57 = scmp.eq.s32.totalorder %s28, 3
      %p58 = por %p56, %p57
      %p59 = scmp.ne.s32.totalorder %s48, %s49
      %p60 = scmp.eq.s32.totalorder %s28, 0
      %p61 = por %p59, %p60
      %p62 = scmp.ne.s32.totalorder %s48, %s49
      %p63 = scmp.eq.s32.totalorder %s29, 3
      %p64 = por %p62, %p63
      %p66 = scmp.ne.s32.totalorder %s49, %s65
      %p67 = scmp.eq.s32.totalorder %s29, 0
      %p68 = por %p66, %p67
      %s70 = sadd.s32 %s69, 1
      %p73 = scmp.eq.s32.totalorder %s23, 3
      %p74 = scmp.ne.s32.totalorder %s69, %s71
      %p75 = scmp.eq.s32.totalorder %s23, 0
      %p76 = por %p74, %p75
      %p77 = scmp.ne.s32.totalorder %s69, %s71
      %p78 = scmp.eq.s32.totalorder %s28, 3
      %p79 = por %p77, %p78
      %p80 = scmp.ne.s32.totalorder %s71, %s72
      %p81 = scmp.eq.s32.totalorder %s28, 0
      %p82 = por %p80, %p81
      %p83 = scmp.ne.s32.totalorder %s71, %s72
      %p84 = scmp.eq.s32.totalorder %s29, 3
      %p85 = por %p83, %p84
      %p87 = scmp.ne.s32.totalorder %s72, %s86
      %p88 = scmp.eq.s32.totalorder %s29, 0
      %p89 = por %p87, %p88
      %s91 = sadd.s32 %s90, 1
      %p94 = scmp.eq.s32.totalorder %s23, 3
      %p95 = scmp.ne.s32.totalorder %s90, %s92
      %p96 = scmp.eq.s32.totalorder %s23, 0
      %p97 = por %p95, %p96
      %p98 = scmp.ne.s32.totalorder %s90, %s92
      %p99 = scmp.eq.s32.totalorder %s28, 3
      %p100 = por %p98, %p99
      %p101 = scmp.ne.s32.totalorder %s92, %s93
      %p102 = scmp.eq.s32.totalorder %s28, 0
      %p103 = por %p101, %p102
      %p104 = scmp.ne.s32.totalorder %s92, %s93
      %p105 = scmp.eq.s32.totalorder %s29, 3
      %p106 = por %p104, %p105
      %p108 = scmp.ne.s32.totalorder %s93, %s107
      %p109 = scmp.eq.s32.totalorder %s29, 0
      %p110 = por %p108, %p109
      %s112 = sadd.s32 %s111, 1
      %p115 = scmp.eq.s32.totalorder %s23, 3
      %p116 = scmp.ne.s32.totalorder %s111, %s113
      %p117 = scmp.eq.s32.totalorder %s23, 0
      %p118 = por %p116, %p117
      %p119 = scmp.ne.s32.totalorder %s111, %s113
      %p120 = scmp.eq.s32.totalorder %s28, 3
      %p121 = por %p119, %p120
      %p122 = scmp.ne.s32.totalorder %s113, %s114
      %p123 = scmp.eq.s32.totalorder %s28, 0
      %p124 = por %p122, %p123
      %p125 = scmp.ne.s32.totalorder %s113, %s114
      %p126 = scmp.eq.s32.totalorder %s29, 3
      %p127 = por %p125, %p126
      %p129 = scmp.ne.s32.totalorder %s114, %s128
      %p130 = scmp.eq.s32.totalorder %s29, 0
      %p131 = por %p129, %p130
      %s132 = ssub.s32 %s31, %s38
      %p133 = scmp.eq.s32.totalorder %s132, 0
      %s135 = sadd.s32 %s134, 1
      %s136 = scalar_select %p133, %s134, %s135
      %p139 = pneg %p133
      %p140 = scmp.eq.s32.totalorder %s23, 3
      %p141 = por %p139, %p140
      %p142 = scmp.ne.s32.totalorder %s134, %s137
      %p143 = scmp.eq.s32.totalorder %s23, 0
      %p144 = por %p142, %p143
      %p145 = scmp.ne.s32.totalorder %s134, %s137
      %p146 = scmp.eq.s32.totalorder %s28, 3
      %p147 = por %p145, %p146
      %p148 = scmp.ne.s32.totalorder %s137, %s138
      %p149 = scmp.eq.s32.totalorder %s28, 0
      %p150 = por %p148, %p149
      %p151 = scmp.ne.s32.totalorder %s137, %s138
      %p152 = scmp.eq.s32.totalorder %s29, 3
      %p153 = por %p151, %p152
      %p155 = scmp.ne.s32.totalorder %s138, %s154
      %p156 = scmp.eq.s32.totalorder %s29, 0
      %p157 = por %p155, %p156
      %s158 = ssub.s32 %s31, %s38
      %p159 = scmp.eq.s32.totalorder %s158, 0
      %s161 = sadd.s32 %s160, 1
      %s162 = scalar_select %p159, %s160, %s161
      %p165 = pneg %p159
      %p166 = scmp.eq.s32.totalorder %s23, 3
      %p167 = por %p165, %p166
      %p168 = scmp.ne.s32.totalorder %s160, %s163
      %p169 = scmp.eq.s32.totalorder %s23, 0
      %p170 = por %p168, %p169
      %p171 = scmp.ne.s32.totalorder %s160, %s163
      %p172 = scmp.eq.s32.totalorder %s28, 3
      %p173 = por %p171, %p172
      %p174 = scmp.ne.s32.totalorder %s163, %s164
      %p175 = scmp.eq.s32.totalorder %s28, 0
      %p176 = por %p174, %p175
      %p177 = scmp.ne.s32.totalorder %s163, %s164
      %p178 = scmp.eq.s32.totalorder %s29, 3
      %p179 = por %p177, %p178
      %p181 = scmp.ne.s32.totalorder %s164, %s180
      %p182 = scmp.eq.s32.totalorder %s29, 0
      %p183 = por %p181, %p182
      %s184 = ssub.s32 %s31, %s38
      %p185 = scmp.eq.s32.totalorder %s184, 0
      %s187 = sadd.s32 %s186, 1
      %s188 = scalar_select %p185, %s186, %s187
      %p191 = pneg %p185
      %p192 = scmp.eq.s32.totalorder %s23, 3
      %p193 = por %p191, %p192
      %p194 = scmp.ne.s32.totalorder %s186, %s189
      %p195 = scmp.eq.s32.totalorder %s23, 0
      %p196 = por %p194, %p195
      %p197 = scmp.ne.s32.totalorder %s186, %s189
      %p198 = scmp.eq.s32.totalorder %s28, 3
      %p199 = por %p197, %p198
      %p200 = scmp.ne.s32.totalorder %s189, %s190
      %p201 = scmp.eq.s32.totalorder %s28, 0
      %p202 = por %p200, %p201
      %p203 = scmp.ne.s32.totalorder %s189, %s190
      %p204 = scmp.eq.s32.totalorder %s29, 3
      %p205 = por %p203, %p204
      %p207 = scmp.ne.s32.totalorder %s190, %s206
      %p208 = scmp.eq.s32.totalorder %s29, 0
      %p209 = por %p207, %p208
      %s210 = ssub.s32 %s31, %s38
      %p211 = scmp.eq.s32.totalorder %s210, 0
      %s213 = sadd.s32 %s212, 1
      %s214 = scalar_select %p211, %s212, %s213
      %p217 = pneg %p211
      %p218 = scmp.eq.s32.totalorder %s23, 3
      %p219 = por %p217, %p218
      %p220 = scmp.ne.s32.totalorder %s212, %s215
      %p221 = scmp.eq.s32.totalorder %s23, 0
      %p222 = por %p220, %p221
      %p223 = scmp.ne.s32.totalorder %s212, %s215
      %p224 = scmp.eq.s32.totalorder %s28, 3
      %p225 = por %p223, %p224
      %p226 = scmp.ne.s32.totalorder %s215, %s216
      %p227 = scmp.eq.s32.totalorder %s28, 0
      %p228 = por %p226, %p227
      %p229 = scmp.ne.s32.totalorder %s215, %s216
      %p230 = scmp.eq.s32.totalorder %s29, 3
      %p231 = por %p229, %p230
      %p233 = scmp.ne.s32.totalorder %s216, %s232
      %p234 = scmp.eq.s32.totalorder %s29, 0
      %p235 = por %p233, %p234
      %s236 = ssub.s32 %s31, %s38
      %p237 = scmp.eq.s32.totalorder %s236, 0
      %s239 = sadd.s32 %s238, 1
      %s240 = scalar_select %p237, %s238, %s239
      %p243 = pneg %p237
      %p244 = scmp.eq.s32.totalorder %s23, 3
      %p245 = por %p243, %p244
      %p246 = scmp.ne.s32.totalorder %s238, %s241
      %p247 = scmp.eq.s32.totalorder %s23, 0
      %p248 = por %p246, %p247
      %p249 = scmp.ne.s32.totalorder %s238, %s241
      %p250 = scmp.eq.s32.totalorder %s28, 3
      %p251 = por %p249, %p250
      %p252 = scmp.ne.s32.totalorder %s241, %s242
      %p253 = scmp.eq.s32.totalorder %s28, 0
      %p254 = por %p252, %p253
      %p255 = scmp.ne.s32.totalorder %s241, %s242
      %p256 = scmp.eq.s32.totalorder %s29, 3
      %p257 = por %p255, %p256
      %p259 = scmp.ne.s32.totalorder %s242, %s258
      %p260 = scmp.eq.s32.totalorder %s29, 0
      %p261 = por %p259, %p260
      %s262 = ssub.s32 %s31, %s38
      %p263 = scmp.eq.s32.totalorder %s262, 0
      %s265 = sadd.s32 %s264, 1
      %s266 = scalar_select %p263, %s264, %s265
      %p269 = pneg %p263
      %p270 = scmp.eq.s32.totalorder %s23, 3
      %p271 = por %p269, %p270
      %p272 = scmp.ne.s32.totalorder %s264, %s267
      %p273 = scmp.eq.s32.totalorder %s23, 0
      %p274 = por %p272, %p273
      %p275 = scmp.ne.s32.totalorder %s264, %s267
      %p276 = scmp.eq.s32.totalorder %s28, 3
      %p277 = por %p275, %p276
      %p278 = scmp.ne.s32.totalorder %s267, %s268
      %p279 = scmp.eq.s32.totalorder %s28, 0
      %p280 = por %p278, %p279
      %p281 = scmp.ne.s32.totalorder %s267, %s268
      %p282 = scmp.eq.s32.totalorder %s29, 3
      %p283 = por %p281, %p282
      %p285 = scmp.ne.s32.totalorder %s268, %s284
      %p286 = scmp.eq.s32.totalorder %s29, 0
      %p287 = por %p285, %p286
      %s288 = ssub.s32 %s31, %s38
      %p289 = scmp.eq.s32.totalorder %s288, 0
      %s291 = sadd.s32 %s290, 1
      %s292 = scalar_select %p289, %s290, %s291
      %p295 = pneg %p289
      %p296 = scmp.eq.s32.totalorder %s23, 3
      %p297 = por %p295, %p296
      %p298 = scmp.ne.s32.totalorder %s290, %s293
      %p299 = scmp.eq.s32.totalorder %s23, 0
      %p300 = por %p298, %p299
      %p301 = scmp.ne.s32.totalorder %s290, %s293
      %p302 = scmp.eq.s32.totalorder %s28, 3
      %p303 = por %p301, %p302
      %p304 = scmp.ne.s32.totalorder %s293, %s294
      %p305 = scmp.eq.s32.totalorder %s28, 0
      %p306 = por %p304, %p305
      %p307 = scmp.ne.s32.totalorder %s293, %s294
      %p308 = scmp.eq.s32.totalorder %s29, 3
      %p309 = por %p307, %p308
      %p311 = scmp.ne.s32.totalorder %s294, %s310
      %p312 = scmp.eq.s32.totalorder %s29, 0
      %p313 = por %p311, %p312
      %s314 = ssub.s32 %s31, %s38
      %p315 = scmp.eq.s32.totalorder %s314, 0
      %s317 = sadd.s32 %s316, 1
      %s318 = scalar_select %p315, %s316, %s317
      %p321 = pneg %p315
      %p322 = scmp.eq.s32.totalorder %s23, 3
      %p323 = por %p321, %p322
      %p324 = scmp.ne.s32.totalorder %s316, %s319
      %p325 = scmp.eq.s32.totalorder %s23, 0
      %p326 = por %p324, %p325
      %p327 = scmp.ne.s32.totalorder %s316, %s319
      %p328 = scmp.eq.s32.totalorder %s28, 3
      %p329 = por %p327, %p328
      %p330 = scmp.ne.s32.totalorder %s319, %s320
      %p331 = scmp.eq.s32.totalorder %s28, 0
      %p332 = por %p330, %p331
      %p333 = scmp.ne.s32.totalorder %s319, %s320
      %p334 = scmp.eq.s32.totalorder %s29, 3
      %p335 = por %p333, %p334
      %p337 = scmp.ne.s32.totalorder %s320, %s336
      %p338 = scmp.eq.s32.totalorder %s29, 0
      %p339 = por %p337, %p338
      %s341 = sadd.s32 %s340, 1
      %p344 = scmp.eq.s32.totalorder %s23, 3
      %p345 = scmp.ne.s32.totalorder %s340, %s342
      %p346 = scmp.eq.s32.totalorder %s23, 0
      %p347 = por %p345, %p346
      %p348 = scmp.ne.s32.totalorder %s340, %s342
      %p349 = scmp.eq.s32.totalorder %s28, 3
      %p350 = por %p348, %p349
      %p351 = scmp.ne.s32.totalorder %s342, %s343
      %p352 = scmp.eq.s32.totalorder %s28, 0
      %p353 = por %p351, %p352
      %p354 = scmp.ne.s32.totalorder %s342, %s343
      %p355 = scmp.eq.s32.totalorder %s29, 3
      %p356 = por %p354, %p355
      %p358 = scmp.ne.s32.totalorder %s343, %s357
      %p359 = scmp.eq.s32.totalorder %s29, 0
      %p360 = por %p358, %p359
      %s362 = sadd.s32 %s361, 1
      %p365 = scmp.eq.s32.totalorder %s23, 3
      %p366 = scmp.ne.s32.totalorder %s361, %s363
      %p367 = scmp.eq.s32.totalorder %s23, 0
      %p368 = por %p366, %p367
      %p369 = scmp.ne.s32.totalorder %s361, %s363
      %p370 = scmp.eq.s32.totalorder %s28, 3
      %p371 = por %p369, %p370
      %p372 = scmp.ne.s32.totalorder %s363, %s364
      %p373 = scmp.eq.s32.totalorder %s28, 0
      %p374 = por %p372, %p373
      %p375 = scmp.ne.s32.totalorder %s363, %s364
      %p376 = scmp.eq.s32.totalorder %s29, 3
      %p377 = por %p375, %p376
      %p379 = scmp.ne.s32.totalorder %s364, %s378
      %p380 = scmp.eq.s32.totalorder %s29, 0
      %p381 = por %p379, %p380
      %s382 = ssub.s32 %s30, %s42
      %p383 = scmp.eq.s32.totalorder %s382, 0
      %s385 = sadd.s32 %s384, 1
      %s386 = scalar_select %p383, %s384, %s385
      %p389 = pneg %p383
      %p390 = scmp.eq.s32.totalorder %s23, 3
      %p391 = por %p389, %p390
      %p392 = scmp.ne.s32.totalorder %s384, %s387
      %p393 = scmp.eq.s32.totalorder %s23, 0
      %p394 = por %p392, %p393
      %p395 = scmp.ne.s32.totalorder %s384, %s387
      %p396 = scmp.eq.s32.totalorder %s28, 3
      %p397 = por %p395, %p396
      %p398 = scmp.ne.s32.totalorder %s387, %s388
      %p399 = scmp.eq.s32.totalorder %s28, 0
      %p400 = por %p398, %p399
      %p401 = scmp.ne.s32.totalorder %s387, %s388
      %p402 = scmp.eq.s32.totalorder %s29, 3
      %p403 = por %p401, %p402
      %p405 = scmp.ne.s32.totalorder %s388, %s404
      %p406 = scmp.eq.s32.totalorder %s29, 0
      %p407 = por %p405, %p406
      %p408 = scmp.le.s32.totalorder 1, %s23
      %p409 = scmp.lt.s32.totalorder %s23, 5
      %p410 = pnand %p408, %p409
      %p411 = pneg %p410
      // Predicated region
      $region9: #{transformer_forward.1} parent=5 // pred_check
        _
      $region10: #{transformer_forward.1} parent=5 // pred_check_branch
        %413 = sbr.rel (%p410) target = $region12
      $region11: #{transformer_forward.1} parent=5 // pred_region
        %s414 = ssub.s32 %s23, 1
        // Predicated region
        $region13: #{transformer_forward.1} parent=11 // pred_check
          %p415 = pneg %p82
        $region14: #{transformer_forward.1} parent=11 // pred_check_branch
          %417 = sbr.rel (%p415) target = $region16
        $region15: #{transformer_forward.1} parent=11 // pred_region
          _
        $region16: #{transformer_forward.1} parent=11 // pred_fallthru
          _
        // Predicated region
        $region17: #{transformer_forward.1} parent=11 // pred_check
          %p418 = pneg %p103
        $region18: #{transformer_forward.1} parent=11 // pred_check_branch
          %420 = sbr.rel (%p418) target = $region20
        $region19: #{transformer_forward.1} parent=11 // pred_region
          _
        $region20: #{transformer_forward.1} parent=11 // pred_fallthru
          _
        // Predicated region
        $region21: #{transformer_forward.1} parent=11 // pred_check
          %p421 = pneg %p124
        $region22: #{transformer_forward.1} parent=11 // pred_check_branch
          %423 = sbr.rel (%p421) target = $region24
        $region23: #{transformer_forward.1} parent=11 // pred_region
          _
        $region24: #{transformer_forward.1} parent=11 // pred_fallthru
          _
        // Predicated region
        $region25: #{transformer_forward.1} parent=11 // pred_check
          %p424 = pneg %p353
        $region26: #{transformer_forward.1} parent=11 // pred_check_branch
          %426 = sbr.rel (%p424) target = $region28
        $region27: #{transformer_forward.1} parent=11 // pred_region
          _
        $region28: #{transformer_forward.1} parent=11 // pred_fallthru
          _
        // Predicated region
        $region29: #{transformer_forward.1} parent=11 // pred_check
          %p427 = pneg %p374
        $region30: #{transformer_forward.1} parent=11 // pred_check_branch
          %429 = sbr.rel (%p427) target = $region32
        $region31: #{transformer_forward.1} parent=11 // pred_region
          _
        $region32: #{transformer_forward.1} parent=11 // pred_fallthru
          _
      $region12: #{transformer_forward.1} parent=5 // pred_fallthru
        _
      %p430 = scmp.lt.s32.totalorder %s23, 4
      // Predicated region
      $region33: #{transformer_forward.1} parent=5 // pred_check
        %p431 = pneg %p430
      $region34: #{transformer_forward.1} parent=5 // pred_check_branch
        %433 = sbr.rel (%p431) target = $region36
      $region35: #{transformer_forward.1} parent=5 // pred_region
        // Predicated region
        $region37: #{transformer_forward.1} parent=35 // pred_check
          %p434 = pneg %p55
        $region38: #{transformer_forward.1} parent=35 // pred_check_branch
          %436 = sbr.rel (%p434) target = $region40
        $region39: #{transformer_forward.1} parent=35 // pred_region
          %p437 = scmp.lt.s32.totalorder %s30, 1
          %s438 = scalar_select %p437, %s30, 1
          %s439 = smul.addr %s438, 8
          %s440 = scalar_lea.vmem %s0, %s439
        $region40: #{transformer_forward.1} parent=35 // pred_fallthru
          _
        // Predicated region
        $region41: #{transformer_forward.1} parent=35 // pred_check
          %p441 = pneg %p144
        $region42: #{transformer_forward.1} parent=35 // pred_check_branch
          %443 = sbr.rel (%p441) target = $region44
        $region43: #{transformer_forward.1} parent=35 // pred_region
          %p444 = scmp.lt.s32.totalorder %s31, 1
          %s445 = scalar_select %p444, %s31, 1
          %s446 = scalar_lea.vmem %s4, %s445
        $region44: #{transformer_forward.1} parent=35 // pred_fallthru
          _
        // Predicated region
        $region45: #{transformer_forward.1} parent=35 // pred_check
          %p447 = pneg %p170
        $region46: #{transformer_forward.1} parent=35 // pred_check_branch
          %449 = sbr.rel (%p447) target = $region48
        $region47: #{transformer_forward.1} parent=35 // pred_region
          %p450 = scmp.lt.s32.totalorder %s31, 1
          %s451 = scalar_select %p450, %s31, 1
          %s452 = smul.addr %s451, 4
          %s453 = smul.addr %s452, 8
          %s454 = scalar_lea.vmem %s5, %s453
        $region48: #{transformer_forward.1} parent=35 // pred_fallthru
          _
        // Predicated region
        $region49: #{transformer_forward.1} parent=35 // pred_check
          %p455 = pneg %p196
        $region50: #{transformer_forward.1} parent=35 // pred_check_branch
          %457 = sbr.rel (%p455) target = $region52
        $region51: #{transformer_forward.1} parent=35 // pred_region
          %p458 = scmp.lt.s32.totalorder %s31, 1
          %s459 = scalar_select %p458, %s31, 1
          %s460 = smul.addr %s459, 4
          %s461 = smul.addr %s460, 8
          %s462 = scalar_lea.vmem %s6, %s461
        $region52: #{transformer_forward.1} parent=35 // pred_fallthru
          _
        // Predicated region
        $region53: #{transformer_forward.1} parent=35 // pred_check
          %p463 = pneg %p222
        $region54: #{transformer_forward.1} parent=35 // pred_check_branch
          %465 = sbr.rel (%p463) target = $region56
        $region55: #{transformer_forward.1} parent=35 // pred_region
          %p466 = scmp.lt.s32.totalorder %s31, 1
          %s467 = scalar_select %p466, %s31, 1
          %s468 = smul.addr %s467, 4
          %s469 = smul.addr %s468, 8
          %s470 = scalar_lea.vmem %s7, %s469
        $region56: #{transformer_forward.1} parent=35 // pred_fallthru
          _
        // Predicated region
        $region57: #{transformer_forward.1} parent=35 // pred_check
          %p471 = pneg %p248
        $region58: #{transformer_forward.1} parent=35 // pred_check_branch
          %473 = sbr.rel (%p471) target = $region60
        $region59: #{transformer_forward.1} parent=35 // pred_region
          %p474 = scmp.lt.s32.totalorder %s31, 1
          %s475 = scalar_select %p474, %s31, 1
          %s476 = scalar_lea.vmem %s8, %s475
        $region60: #{transformer_forward.1} parent=35 // pred_fallthru
          _
        // Predicated region
        $region61: #{transformer_forward.1} parent=35 // pred_check
          %p477 = pneg %p274
        $region62: #{transformer_forward.1} parent=35 // pred_check_branch
          %479 = sbr.rel (%p477) target = $region64
        $region63: #{transformer_forward.1} parent=35 // pred_region
          %p480 = scmp.lt.s32.totalorder %s31, 1
          %s481 = scalar_select %p480, %s31, 1
          %s482 = smul.addr %s481, 4
          %s483 = smul.addr %s482, 8
          %s484 = scalar_lea.vmem %s9, %s483
        $region64: #{transformer_forward.1} parent=35 // pred_fallthru
          _
        // Predicated region
        $region65: #{transformer_forward.1} parent=35 // pred_check
          %p485 = pneg %p300
        $region66: #{transformer_forward.1} parent=35 // pred_check_branch
          %487 = sbr.rel (%p485) target = $region68
        $region67: #{transformer_forward.1} parent=35 // pred_region
          %p488 = scmp.lt.s32.totalorder %s31, 1
          %s489 = scalar_select %p488, %s31, 1
          %s490 = smul.addr %s489, 4
          %s491 = smul.addr %s490, 8
          %s492 = scalar_lea.vmem %s10, %s491
        $region68: #{transformer_forward.1} parent=35 // pred_fallthru
          _
        // Predicated region
        $region69: #{transformer_forward.1} parent=35 // pred_check
          %p493 = pneg %p326
        $region70: #{transformer_forward.1} parent=35 // pred_check_branch
          %495 = sbr.rel (%p493) target = $region72
        $region71: #{transformer_forward.1} parent=35 // pred_region
          %p496 = scmp.lt.s32.totalorder %s31, 1
          %s497 = scalar_select %p496, %s31, 1
          %s498 = smul.addr %s497, 12
          %s499 = smul.addr %s498, 8
          %s500 = scalar_lea.vmem %s11, %s499
        $region72: #{transformer_forward.1} parent=35 // pred_fallthru
          _
      $region36: #{transformer_forward.1} parent=5 // pred_fallthru
        _
      %p501 = scmp.le.s32.totalorder 1, %s23
      %p502 = scmp.lt.s32.totalorder %s23, 5
      %p503 = pnand %p501, %p502
      %p504 = pneg %p503
      // Predicated region
      $region73: #{transformer_forward.1} parent=5 // pred_check
        _
      $region74: #{transformer_forward.1} parent=5 // pred_check_branch
        %506 = sbr.rel (%p503) target = $region76
      $region75: #{transformer_forward.1} parent=5 // pred_region
        %s507 = ssub.s32 %s23, 1
        %p508 = scmp.lt.s32.totalorder %s32, 1
        %s509 = scalar_select %p508, %s32, 1
        %s510 = smul.addr %s509, 8
        %s511 = scalar_lea.vmem %s0, %s510
        %p512 = pneg %p61
        %p513 = pneg %p58
        %p514 = pneg %p82
        %p515 = pneg %p79
        %p516 = pneg %p103
        %p517 = pneg %p100
        %p518 = pneg %p124
        %p519 = pneg %p121
        %p520 = scmp.lt.s32.totalorder %s33, 1
        %s521 = scalar_select %p520, %s33, 1
        %s522 = scalar_lea.vmem %s4, %s521
        %p523 = pneg %p150
        %p524 = pneg %p147
        %p525 = scmp.lt.s32.totalorder %s33, 1
        %s526 = scalar_select %p525, %s33, 1
        %s527 = smul.addr %s526, 4
        %s528 = smul.addr %s527, 8
        %s529 = scalar_lea.vmem %s5, %s528
        %p530 = pneg %p176
        %p531 = pneg %p173
        %p532 = scmp.lt.s32.totalorder %s33, 1
        %s533 = scalar_select %p532, %s33, 1
        %s534 = smul.addr %s533, 4
        %s535 = smul.addr %s534, 8
        %s536 = scalar_lea.vmem %s6, %s535
        %p537 = pneg %p202
        %p538 = pneg %p199
        %p539 = scmp.lt.s32.totalorder %s33, 1
        %s540 = scalar_select %p539, %s33, 1
        %s541 = smul.addr %s540, 4
        %s542 = smul.addr %s541, 8
        %s543 = scalar_lea.vmem %s7, %s542
        %p544 = pneg %p228
        %p545 = pneg %p225
        %p546 = scmp.lt.s32.totalorder %s33, 1
        %s547 = scalar_select %p546, %s33, 1
        %s548 = scalar_lea.vmem %s8, %s547
        %p549 = pneg %p254
        %p550 = pneg %p251
        %p551 = scmp.lt.s32.totalorder %s33, 1
        %s552 = scalar_select %p551, %s33, 1
        %s553 = smul.addr %s552, 4
        %s554 = smul.addr %s553, 8
        %s555 = scalar_lea.vmem %s9, %s554
        %p556 = pneg %p280
        %p557 = pneg %p277
        %p558 = scmp.lt.s32.totalorder %s33, 1
        %s559 = scalar_select %p558, %s33, 1
        %s560 = smul.addr %s559, 4
        %s561 = smul.addr %s560, 8
        %s562 = scalar_lea.vmem %s10, %s561
        %p563 = pneg %p306
        %p564 = pneg %p303
        %p565 = scmp.lt.s32.totalorder %s33, 1
        %s566 = scalar_select %p565, %s33, 1
        %s567 = smul.addr %s566, 12
        %s568 = smul.addr %s567, 8
        %s569 = scalar_lea.vmem %s11, %s568
        %p570 = pneg %p332
        %p571 = pneg %p329
        %p572 = pneg %p353
        %p573 = pneg %p350
        %p574 = pneg %p374
        %p575 = pneg %p371
        %p576 = pneg %p400
        %p577 = pneg %p397
        %s578 = sand.u32 %s387, 1
        %s579 = scalar_lea.sflag [#allocation4], %s578
        %s580 = sand.u32 %s387, 1
        %s581 = smul.addr %s580, 8
        %s582 = scalar_lea.vmem [#allocation3], %s581
        %p583 = scmp.lt.s32.totalorder %s32, 1
        %s584 = scalar_select %p583, %s32, 1
        %s585 = smul.addr %s584, 8
        %s586 = scalar_lea.vmem %s0, %s585
        %p587 = scmp.lt.s32.totalorder %s33, 1
        %s588 = scalar_select %p587, %s33, 1
        %s589 = scalar_lea.vmem %s4, %s588
        %p590 = scmp.lt.s32.totalorder %s33, 1
        %s591 = scalar_select %p590, %s33, 1
        %s592 = smul.addr %s591, 4
        %s593 = smul.addr %s592, 8
        %s594 = scalar_lea.vmem %s5, %s593
        %p595 = scmp.lt.s32.totalorder %s33, 1
        %s596 = scalar_select %p595, %s33, 1
        %s597 = smul.addr %s596, 4
        %s598 = smul.addr %s597, 8
        %s599 = scalar_lea.vmem %s6, %s598
        %p600 = scmp.lt.s32.totalorder %s33, 1
        %s601 = scalar_select %p600, %s33, 1
        %s602 = smul.addr %s601, 4
        %s603 = smul.addr %s602, 8
        %s604 = scalar_lea.vmem %s7, %s603
        %p605 = scmp.lt.s32.totalorder %s33, 1
        %s606 = scalar_select %p605, %s33, 1
        %s607 = scalar_lea.vmem %s8, %s606
        %p608 = scmp.lt.s32.totalorder %s33, 1
        %s609 = scalar_select %p608, %s33, 1
        %s610 = smul.addr %s609, 4
        %s611 = smul.addr %s610, 8
        %s612 = scalar_lea.vmem %s9, %s611
        %p613 = scmp.lt.s32.totalorder %s33, 1
        %s614 = scalar_select %p613, %s33, 1
        %s615 = smul.addr %s614, 4
        %s616 = smul.addr %s615, 8
        %s617 = scalar_lea.vmem %s10, %s616
        %p618 = scmp.lt.s32.totalorder %s33, 1
        %s619 = scalar_select %p618, %s33, 1
        %s620 = smul.addr %s619, 12
        %s621 = smul.addr %s620, 8
        %s622 = scalar_lea.vmem %s11, %s621
        %p623 = scmp.eq.s32.totalorder %s33, 0
        // Predicated region
        $region77: #{transformer_forward.1} parent=75 // pred_check
          %p624 = pneg %p623
        $region78: #{transformer_forward.1} parent=75 // pred_check_branch
          %626 = sbr.rel (%p624) target = $region80
        $region79: #{transformer_forward.1} parent=75 // pred_region
          %v627 = vld [vmem:[%s586] sm:$0xff]
          %vm628 = vcmask 261120
          %629 = vst.msk [vmem:[#allocation2] sm:$0xff] %vm628, %v627
        $region80: #{transformer_forward.1} parent=75 // pred_fallthru
          _
        %v630 = vld [vmem:[#allocation2] sm:$0xff]
        %v631 = vmul.f32 %v630, %v630
        %vm632 = vcmask 261120
        %v633 = vsel %vm632, %v631, 0.0
        %634 = vadd.xlane.f32.xlu0 %v633
        %v635 = vpop.xlane.xlu0 %634
        %v636 = vrcp.pop 32.0
        %v637 = vmul.f32 %v635, %v636
        %v638 = vadd.f32 %v637, 1e-05
        %v639 = vrsqrt.pop %v638
        %v640 = vmul.f32 %v630, %v639
        %v641 = vld [vmem:[%s589] sm:$0x1]
        %v643 = vlaneseq
        %v644 = vshrl.u32 %v643, 7
        %v645 = vsub.s32 0, %v644
        %v646 = vrot.slane %v641, %v645
        %v648 = vmul.f32 %v640, %v646
        %v649 = vld [vmem:[%s594] sm:$0xff]
        %v650 = vld [vmem:[%s594 + $0x8] sm:$0xff]
        %v651 = vld [vmem:[%s594 + $0x10] sm:$0xff]
        %v652 = vld [vmem:[%s594 + $0x18] sm:$0xff]
        %v654 = vsel %vm632, %v648, 0
        %656 = vmatprep.subr.mxu0 0.0
        %657 = vmatpush1.msra.mxu0 %v649
        %658 = vmatprep.subr.mxu0 0.0
        %659 = vmatpush1.msra.mxu0 %v650
        %660 = vmatprep.subr.mxu0 0.0
        %661 = vmatpush1.msra.mxu0 %v651
        %662 = vmatprep.subr.mxu0 0.0
        %663 = vmatpush1.msra.mxu0 %v652
        %664 = vmatprep.subr.mxu0 0.0
        %665 = vmatpush1.msra.mxu0 0.0
        %666 = vmatprep.subr.mxu0 0.0
        %667 = vmatpush1.msra.mxu0 0.0
        %668 = vmatprep.subr.mxu0 0.0
        %669 = vmatpush1.msra.mxu0 0.0
        %670 = vmatprep.subr.mxu0 0.0
        %671 = vmatpush1.msra.mxu0 0.0
        %672 = vmatprep.subr.mxu0 0.0
        %673 = vmatpush1.msra.mxu0 0.0
        %674 = vmatprep.subr.mxu0 0.0
        %675 = vmatpush1.msra.mxu0 0.0
        %676 = vmatprep.subr.mxu0 0.0
        %677 = vmatpush1.msra.mxu0 0.0
        %678 = vmatprep.subr.mxu0 0.0
        %679 = vmatpush1.msra.mxu0 0.0
        %680 = vmatprep.subr.mxu0 0.0
        %681 = vmatpush1.msra.mxu0 0.0
        %682 = vmatprep.subr.mxu0 0.0
        %683 = vmatpush1.msra.mxu0 0.0
        %684 = vmatprep.subr.mxu0 0.0
        %685 = vmatpush1.msra.mxu0 0.0
        %686 = vmatprep.subr.mxu0 0.0
        %687 = vmatpush1.msra.mxu0 0.0
        %688 = vmatprep.subr.mxu0 0.0
        %689 = vmatpush1.msra.mxu0 0.0
        %690 = vmatprep.subr.mxu0 0.0
        %691 = vmatpush1.msra.mxu0 0.0
        %692 = vmatprep.subr.mxu0 0.0
        %693 = vmatpush1.msra.mxu0 0.0
        %694 = vmatprep.subr.mxu0 0.0
        %695 = vmatpush1.msra.mxu0 0.0
        %696 = vmatprep.subr.mxu0 0.0
        %697 = vmatpush1.msra.mxu0 0.0
        %698 = vmatprep.subr.mxu0 0.0
        %699 = vmatpush1.msra.mxu0 0.0
        %700 = vmatprep.subr.mxu0 0.0
        %701 = vmatpush1.msra.mxu0 0.0
        %702 = vmatprep.subr.mxu0 0.0
        %703 = vmatpush1.msra.mxu0 0.0
        %704 = vmatprep.subr.mxu0 0.0
        %705 = vmatpush1.msra.mxu0 0.0
        %706 = vmatprep.subr.mxu0 0.0
        %707 = vmatpush1.msra.mxu0 0.0
        %708 = vmatprep.subr.mxu0 0.0
        %709 = vmatpush1.msra.mxu0 0.0
        %710 = vmatprep.subr.mxu0 0.0
        %711 = vmatpush1.msra.mxu0 0.0
        %712 = vmatprep.subr.mxu0 0.0
        %713 = vmatpush1.msra.mxu0 0.0
        %714 = vmatprep.subr.mxu0 0.0
        %715 = vmatpush1.msra.mxu0 0.0
        %716 = vmatprep.subr.mxu0 0.0
        %717 = vmatpush1.msra.mxu0 0.0
        %718 = vmatprep.subr.mxu0 0.0
        %719 = vmatpush1.msra.mxu0 0.0
        %720 = vmatprep.mubr.f32.mxu0 0.0
        %721 = vmatmul.mubr.f32.gmra.mrb[0].mxu0 %v654
        %v722 = vpop.f32.mrb[0].mxu0
        %v723 = vadd.f32 0.0, %v722
        %v724 = vpop.f32.mrb[0].mxu0
        %725 = vdwg.mxu0
        %v726 = vld [vmem:[%s599] sm:$0xff]
        %v727 = vld [vmem:[%s599 + $0x8] sm:$0xff]
        %v728 = vld [vmem:[%s599 + $0x10] sm:$0xff]
        %v729 = vld [vmem:[%s599 + $0x18] sm:$0xff]
        %730 = vmatprep.subr.mxu0 0.0
        %731 = vmatpush1.msra.mxu0 %v726
        %732 = vmatprep.subr.mxu0 0.0
        %733 = vmatpush1.msra.mxu0 %v727
        %734 = vmatprep.subr.mxu0 0.0
        %735 = vmatpush1.msra.mxu0 %v728
        %736 = vmatprep.subr.mxu0 0.0
        %737 = vmatpush1.msra.mxu0 %v729
        %738 = vmatprep.subr.mxu0 0.0
        %739 = vmatpush1.msra.mxu0 0.0
        %740 = vmatprep.subr.mxu0 0.0
        %741 = vmatpush1.msra.mxu0 0.0
        %742 = vmatprep.subr.mxu0 0.0
        %743 = vmatpush1.msra.mxu0 0.0
        %744 = vmatprep.subr.mxu0 0.0
        %745 = vmatpush1.msra.mxu0 0.0
        %746 = vmatprep.subr.mxu0 0.0
        %747 = vmatpush1.msra.mxu0 0.0
        %748 = vmatprep.subr.mxu0 0.0
        %749 = vmatpush1.msra.mxu0 0.0
        %750 = vmatprep.subr.mxu0 0.0
        %751 = vmatpush1.msra.mxu0 0.0
        %752 = vmatprep.subr.mxu0 0.0
        %753 = vmatpush1.msra.mxu0 0.0
        %754 = vmatprep.subr.mxu0 0.0
        %755 = vmatpush1.msra.mxu0 0.0
        %756 = vmatprep.subr.mxu0 0.0
        %757 = vmatpush1.msra.mxu0 0.0
        %758 = vmatprep.subr.mxu0 0.0
        %759 = vmatpush1.msra.mxu0 0.0
        %760 = vmatprep.subr.mxu0 0.0
        %761 = vmatpush1.msra.mxu0 0.0
        %762 = vmatprep.subr.mxu0 0.0
        %763 = vmatpush1.msra.mxu0 0.0
        %764 = vmatprep.subr.mxu0 0.0
        %765 = vmatpush1.msra.mxu0 0.0
        %766 = vmatprep.subr.mxu0 0.0
        %767 = vmatpush1.msra.mxu0 0.0
        %768 = vmatprep.subr.mxu0 0.0
        %769 = vmatpush1.msra.mxu0 0.0
        %770 = vmatprep.subr.mxu0 0.0
        %771 = vmatpush1.msra.mxu0 0.0
        %772 = vmatprep.subr.mxu0 0.0
        %773 = vmatpush1.msra.mxu0 0.0
        %774 = vmatprep.subr.mxu0 0.0
        %775 = vmatpush1.msra.mxu0 0.0
        %776 = vmatprep.subr.mxu0 0.0
        %777 = vmatpush1.msra.mxu0 0.0
        %778 = vmatprep.subr.mxu0 0.0
        %779 = vmatpush1.msra.mxu0 0.0
        %780 = vmatprep.subr.mxu0 0.0
        %781 = vmatpush1.msra.mxu0 0.0
        %782 = vmatprep.subr.mxu0 0.0
        %783 = vmatpush1.msra.mxu0 0.0
        %784 = vmatprep.subr.mxu0 0.0
        %785 = vmatpush1.msra.mxu0 0.0
        %786 = vmatprep.subr.mxu0 0.0
        %787 = vmatpush1.msra.mxu0 0.0
        %788 = vmatprep.subr.mxu0 0.0
        %789 = vmatpush1.msra.mxu0 0.0
        %790 = vmatprep.subr.mxu0 0.0
        %791 = vmatpush1.msra.mxu0 0.0
        %792 = vmatprep.subr.mxu0 0.0
        %793 = vmatpush1.msra.mxu0 0.0
        %794 = vmatprep.mubr.f32.mxu0 0.0
        %795 = vmatmul.mubr.f32.gmra.mrb[0].mxu0 %v654
        %v796 = vpop.f32.mrb[0].mxu0
        %v797 = vadd.f32 0.0, %v796
        %v798 = vpop.f32.mrb[0].mxu0
        %799 = vdwg.mxu0
        %v800 = vld [vmem:[%s1] sm:$0xff]
        %v801 = vmul.f32 %v723, %v800
        %v802 = vld [vmem:[%s2] sm:$0xff]
        %v803 = vmul.f32 %v797, %v802
        %v804 = vadd.f32 %v801, %v803
        %v805 = vmul.f32 %v804, 0.35355338
        %v806 = vld [vmem:[%s3] sm:$0xff]
        %808 = vrot.lane.b32.xlu0 %v804, 96
        %v809 = vpop.permute.xlu0 %808
        %vm810 = vcmask 64512
        %v812 = vsel %vm810, %v805, 0
        %v814 = vsel %vm810, %v809, 0
        %816 = vmatprep.subr.mxu0 0.0
        %817 = vmatpush1.xpose.msra.mxu0 %v814
        %818 = vmatprep.subr.mxu0 0.0
        %819 = vmatpush1.xpose.msra.mxu0 0.0
        %820 = vmatprep.subr.mxu0 0.0
        %821 = vmatpush1.xpose.msra.mxu0 0.0
        %822 = vmatprep.subr.mxu0 0.0
        %823 = vmatpush1.xpose.msra.mxu0 0.0
        %824 = vmatprep.subr.mxu0 0.0
        %825 = vmatpush1.xpose.msra.mxu0 0.0
        %826 = vmatprep.subr.mxu0 0.0
        %827 = vmatpush1.xpose.msra.mxu0 0.0
        %828 = vmatprep.subr.mxu0 0.0
        %829 = vmatpush1.xpose.msra.mxu0 0.0
        %830 = vmatprep.subr.mxu0 0.0
        %831 = vmatpush1.xpose.msra.mxu0 0.0
        %832 = vmatprep.subr.mxu0 0.0
        %833 = vmatpush1.xpose.msra.mxu0 0.0
        %834 = vmatprep.subr.mxu0 0.0
        %835 = vmatpush1.xpose.msra.mxu0 0.0
        %836 = vmatprep.subr.mxu0 0.0
        %837 = vmatpush1.xpose.msra.mxu0 0.0
        %838 = vmatprep.subr.mxu0 0.0
        %839 = vmatpush1.xpose.msra.mxu0 0.0
        %840 = vmatprep.subr.mxu0 0.0
        %841 = vmatpush1.xpose.msra.mxu0 0.0
        %842 = vmatprep.subr.mxu0 0.0
        %843 = vmatpush1.xpose.msra.mxu0 0.0
        %844 = vmatprep.subr.mxu0 0.0
        %845 = vmatpush1.xpose.msra.mxu0 0.0
        %846 = vmatprep.subr.mxu0 0.0
        %847 = vmatpush1.xpose.msra.mxu0 0.0
        %848 = vmatprep.subr.mxu0 0.0
        %849 = vmatpush1.xpose.msra.mxu0 0.0
        %850 = vmatprep.subr.mxu0 0.0
        %851 = vmatpush1.xpose.msra.mxu0 0.0
        %852 = vmatprep.subr.mxu0 0.0
        %853 = vmatpush1.xpose.msra.mxu0 0.0
        %854 = vmatprep.subr.mxu0 0.0
        %855 = vmatpush1.xpose.msra.mxu0 0.0
        %856 = vmatprep.subr.mxu0 0.0
        %857 = vmatpush1.xpose.msra.mxu0 0.0
        %858 = vmatprep.subr.mxu0 0.0
        %859 = vmatpush1.xpose.msra.mxu0 0.0
        %860 = vmatprep.subr.mxu0 0.0
        %861 = vmatpush1.xpose.msra.mxu0 0.0
        %862 = vmatprep.subr.mxu0 0.0
        %863 = vmatpush1.xpose.msra.mxu0 0.0
        %864 = vmatprep.subr.mxu0 0.0
        %865 = vmatpush1.xpose.msra.mxu0 0.0
        %866 = vmatprep.subr.mxu0 0.0
        %867 = vmatpush1.xpose.msra.mxu0 0.0
        %868 = vmatprep.subr.mxu0 0.0
        %869 = vmatpush1.xpose.msra.mxu0 0.0
        %870 = vmatprep.subr.mxu0 0.0
        %871 = vmatpush1.xpose.msra.mxu0 0.0
        %872 = vmatprep.subr.mxu0 0.0
        %873 = vmatpush1.xpose.msra.mxu0 0.0
        %874 = vmatprep.subr.mxu0 0.0
        %875 = vmatpush1.xpose.msra.mxu0 0.0
        %876 = vmatprep.subr.mxu0 0.0
        %877 = vmatpush1.xpose.msra.mxu0 0.0
        %878 = vmatprep.subr.mxu0 0.0
        %879 = vmatpush1.xpose.msra.mxu0 0.0
        %880 = vmatprep.mubr.f32.mxu0 0.0
        %881 = vmatmul.mubr.f32.gmra.mrb[0].mxu0 %v812
        %v882 = vpop.f32.mrb[0].mxu0
        %v883 = vadd.f32 %v806, %v882
        %v884 = vpop.f32.mrb[0].mxu0
        %885 = vdwg.mxu0
        %v886 = vsel %vm810, %v883, -inf
        %887 = vmax.xlane.f32.xlu0 %v886
        %v888 = vpop.xlane.xlu0 %887
        %v889 = vsub.f32 %v883, %v888
        %v890 = vmul.f32 %v889, 1.442695
        %v891 = vpow.pop %v890
        %v892 = vsel %vm810, %v891, 0.0
        %893 = vadd.xlane.f32.xlu0 %v892
        %v894 = vpop.xlane.xlu0 %893
        %v895 = vrcp.pop %v894
        %v896 = vmul.f32 %v891, %v895
        %897 = vrot.lane.b32.xlu0 %v804, 80
        %v898 = vpop.permute.xlu0 %897
        %v901 = vsel %vm810, %v896, 0
        %903 = vmatprep.subr.mxu0 0.0
        %904 = vmatpush1.msra.mxu0 %v898
        %905 = vmatprep.subr.mxu0 0.0
        %906 = vmatpush1.msra.mxu0 0.0
        %907 = vmatprep.subr.mxu0 0.0
        %908 = vmatpush1.msra.mxu0 0.0
        %909 = vmatprep.subr.mxu0 0.0
        %910 = vmatpush1.msra.mxu0 0.0
        %911 = vmatprep.subr.mxu0 0.0
        %912 = vmatpush1.msra.mxu0 0.0
        %913 = vmatprep.subr.mxu0 0.0
        %914 = vmatpush1.msra.mxu0 0.0
        %915 = vmatprep.subr.mxu0 0.0
        %916 = vmatpush1.msra.mxu0 0.0
        %917 = vmatprep.subr.mxu0 0.0
        %918 = vmatpush1.msra.mxu0 0.0
        %919 = vmatprep.subr.mxu0 0.0
        %920 = vmatpush1.msra.mxu0 0.0
        %921 = vmatprep.subr.mxu0 0.0
        %922 = vmatpush1.msra.mxu0 0.0
        %923 = vmatprep.subr.mxu0 0.0
        %924 = vmatpush1.msra.mxu0 0.0
        %925 = vmatprep.subr.mxu0 0.0
        %926 = vmatpush1.msra.mxu0 0.0
        %927 = vmatprep.subr.mxu0 0.0
        %928 = vmatpush1.msra.mxu0 0.0
        %929 = vmatprep.subr.mxu0 0.0
        %930 = vmatpush1.msra.mxu0 0.0
        %931 = vmatprep.subr.mxu0 0.0
        %932 = vmatpush1.msra.mxu0 0.0
        %933 = vmatprep.subr.mxu0 0.0
        %934 = vmatpush1.msra.mxu0 0.0
        %935 = vmatprep.subr.mxu0 0.0
        %936 = vmatpush1.msra.mxu0 0.0
        %937 = vmatprep.subr.mxu0 0.0
        %938 = vmatpush1.msra.mxu0 0.0
        %939 = vmatprep.subr.mxu0 0.0
        %940 = vmatpush1.msra.mxu0 0.0
        %941 = vmatprep.subr.mxu0 0.0
        %942 = vmatpush1.msra.mxu0 0.0
        %943 = vmatprep.subr.mxu0 0.0
        %944 = vmatpush1.msra.mxu0 0.0
        %945 = vmatprep.subr.mxu0 0.0
        %946 = vmatpush1.msra.mxu0 0.0
        %947 = vmatprep.subr.mxu0 0.0
        %948 = vmatpush1.msra.mxu0 0.0
        %949 = vmatprep.subr.mxu0 0.0
        %950 = vmatpush1.msra.mxu0 0.0
        %951 = vmatprep.subr.mxu0 0.0
        %952 = vmatpush1.msra.mxu0 0.0
        %953 = vmatprep.subr.mxu0 0.0
        %954 = vmatpush1.msra.mxu0 0.0
        %955 = vmatprep.subr.mxu0 0.0
        %956 = vmatpush1.msra.mxu0 0.0
        %957 = vmatprep.subr.mxu0 0.0
        %958 = vmatpush1.msra.mxu0 0.0
        %959 = vmatprep.subr.mxu0 0.0
        %960 = vmatpush1.msra.mxu0 0.0
        %961 = vmatprep.subr.mxu0 0.0
        %962 = vmatpush1.msra.mxu0 0.0
        %963 = vmatprep.subr.mxu0 0.0
        %964 = vmatpush1.msra.mxu0 0.0
        %965 = vmatprep.subr.mxu0 0.0
        %966 = vmatpush1.msra.mxu0 0.0
        %967 = vmatprep.mubr.f32.mxu0 0.0
        %968 = vmatmul.mubr.f32.gmra.mrb[0].mxu0 %v901
        %v969 = vpop.f32.mrb[0].mxu0
        %v970 = vadd.f32 0.0, %v969
        %v971 = vpop.f32.mrb[0].mxu0
        %972 = vdwg.mxu0
        %973 = vrot.lane.b32.xlu0 %v805, 120
        %v974 = vpop.permute.xlu0 %973
        %v975 = vsel %vm810, %v974, 0
        %977 = vmatprep.subr.mxu0 0.0
        %978 = vmatpush1.xpose.msra.mxu0 %v814
        %979 = vmatprep.subr.mxu0 0.0
        %980 = vmatpush1.xpose.msra.mxu0 0.0
        %981 = vmatprep.subr.mxu0 0.0
        %982 = vmatpush1.xpose.msra.mxu0 0.0
        %983 = vmatprep.subr.mxu0 0.0
        %984 = vmatpush1.xpose.msra.mxu0 0.0
        %985 = vmatprep.subr.mxu0 0.0
        %986 = vmatpush1.xpose.msra.mxu0 0.0
        %987 = vmatprep.subr.mxu0 0.0
        %988 = vmatpush1.xpose.msra.mxu0 0.0
        %989 = vmatprep.subr.mxu0 0.0
        %990 = vmatpush1.xpose.msra.mxu0 0.0
        %991 = vmatprep.subr.mxu0 0.0
        %992 = vmatpush1.xpose.msra.mxu0 0.0
        %993 = vmatprep.subr.mxu0 0.0
        %994 = vmatpush1.xpose.msra.mxu0 0.0
        %995 = vmatprep.subr.mxu0 0.0
        %996 = vmatpush1.xpose.msra.mxu0 0.0
        %997 = vmatprep.subr.mxu0 0.0
        %998 = vmatpush1.xpose.msra.mxu0 0.0
        %999 = vmatprep.subr.mxu0 0.0
        %1000 = vmatpush1.xpose.msra.mxu0 0.0
        %1001 = vmatprep.subr.mxu0 0.0
        %1002 = vmatpush1.xpose.msra.mxu0 0.0
        %1003 = vmatprep.subr.mxu0 0.0
        %1004 = vmatpush1.xpose.msra.mxu0 0.0
        %1005 = vmatprep.subr.mxu0 0.0
        %1006 = vmatpush1.xpose.msra.mxu0 0.0
        %1007 = vmatprep.subr.mxu0 0.0
        %1008 = vmatpush1.xpose.msra.mxu0 0.0
        %1009 = vmatprep.subr.mxu0 0.0
        %1010 = vmatpush1.xpose.msra.mxu0 0.0
        %1011 = vmatprep.subr.mxu0 0.0
        %1012 = vmatpush1.xpose.msra.mxu0 0.0
        %1013 = vmatprep.subr.mxu0 0.0
        %1014 = vmatpush1.xpose.msra.mxu0 0.0
        %1015 = vmatprep.subr.mxu0 0.0
        %1016 = vmatpush1.xpose.msra.mxu0 0.0
        %1017 = vmatprep.subr.mxu0 0.0
        %1018 = vmatpush1.xpose.msra.mxu0 0.0
        %1019 = vmatprep.subr.mxu0 0.0
        %1020 = vmatpush1.xpose.msra.mxu0 0.0
        %1021 = vmatprep.subr.mxu0 0.0
        %1022 = vmatpush1.xpose.msra.mxu0 0.0
        %1023 = vmatprep.subr.mxu0 0.0
        %1024 = vmatpush1.xpose.msra.mxu0 0.0
        %1025 = vmatprep.subr.mxu0 0.0
        %1026 = vmatpush1.xpose.msra.mxu0 0.0
        %1027 = vmatprep.subr.mxu0 0.0
        %1028 = vmatpush1.xpose.msra.mxu0 0.0
        %1029 = vmatprep.subr.mxu0 0.0
        %1030 = vmatpush1.xpose.msra.mxu0 0.0
        %1031 = vmatprep.subr.mxu0 0.0
        %1032 = vmatpush1.xpose.msra.mxu0 0.0
        %1033 = vmatprep.subr.mxu0 0.0
        %1034 = vmatpush1.xpose.msra.mxu0 0.0
        %1035 = vmatprep.subr.mxu0 0.0
        %1036 = vmatpush1.xpose.msra.mxu0 0.0
        %1037 = vmatprep.subr.mxu0 0.0
        %1038 = vmatpush1.xpose.msra.mxu0 0.0
        %1039 = vmatprep.subr.mxu0 0.0
        %1040 = vmatpush1.xpose.msra.mxu0 0.0
        %1041 = vmatprep.mubr.f32.mxu0 0.0
        %1042 = vmatmul.mubr.f32.gmra.mrb[0].mxu0 %v975
        %v1043 = vpop.f32.mrb[0].mxu0
        %v1044 = vadd.f32 %v806, %v1043
        %v1045 = vpop.f32.mrb[0].mxu0
        %1046 = vdwg.mxu0
        %v1047 = vsel %vm810, %v1044, -inf
        %1048 = vmax.xlane.f32.xlu0 %v1047
        %v1049 = vpop.xlane.xlu0 %1048
        %v1050 = vsub.f32 %v1044, %v1049
        %v1051 = vmul.f32 %v1050, 1.442695
        %v1052 = vpow.pop %v1051
        %v1053 = vsel %vm810, %v1052, 0.0
        %1054 = vadd.xlane.f32.xlu0 %v1053
        %v1055 = vpop.xlane.xlu0 %1054
        %v1056 = vrcp.pop %v1055
        %v1057 = vmul.f32 %v1052, %v1056
        %v1059 = vsel %vm810, %v1057, 0
        %1061 = vmatprep.subr.mxu0 0.0
        %1062 = vmatpush1.msra.mxu0 %v898
        %1063 = vmatprep.subr.mxu0 0.0
        %1064 = vmatpush1.msra.mxu0 0.0
        %1065 = vmatprep.subr.mxu0 0.0
        %1066 = vmatpush1.msra.mxu0 0.0
        %1067 = vmatprep.subr.mxu0 0.0
        %1068 = vmatpush1.msra.mxu0 0.0
        %1069 = vmatprep.subr.mxu0 0.0
        %1070 = vmatpush1.msra.mxu0 0.0
        %1071 = vmatprep.subr.mxu0 0.0
        %1072 = vmatpush1.msra.mxu0 0.0
        %1073 = vmatprep.subr.mxu0 0.0
        %1074 = vmatpush1.msra.mxu0 0.0
        %1075 = vmatprep.subr.mxu0 0.0
        %1076 = vmatpush1.msra.mxu0 0.0
        %1077 = vmatprep.subr.mxu0 0.0
        %1078 = vmatpush1.msra.mxu0 0.0
        %1079 = vmatprep.subr.mxu0 0.0
        %1080 = vmatpush1.msra.mxu0 0.0
        %1081 = vmatprep.subr.mxu0 0.0
        %1082 = vmatpush1.msra.mxu0 0.0
        %1083 = vmatprep.subr.mxu0 0.0
        %1084 = vmatpush1.msra.mxu0 0.0
        %1085 = vmatprep.subr.mxu0 0.0
        %1086 = vmatpush1.msra.mxu0 0.0
        %1087 = vmatprep.subr.mxu0 0.0
        %1088 = vmatpush1.msra.mxu0 0.0
        %1089 = vmatprep.subr.mxu0 0.0
        %1090 = vmatpush1.msra.mxu0 0.0
        %1091 = vmatprep.subr.mxu0 0.0
        %1092 = vmatpush1.msra.mxu0 0.0
        %1093 = vmatprep.subr.mxu0 0.0
        %1094 = vmatpush1.msra.mxu0 0.0
        %1095 = vmatprep.subr.mxu0 0.0
        %1096 = vmatpush1.msra.mxu0 0.0
        %1097 = vmatprep.subr.mxu0 0.0
        %1098 = vmatpush1.msra.mxu0 0.0
        %1099 = vmatprep.subr.mxu0 0.0
        %1100 = vmatpush1.msra.mxu0 0.0
        %1101 = vmatprep.subr.mxu0 0.0
        %1102 = vmatpush1.msra.mxu0 0.0
        %1103 = vmatprep.subr.mxu0 0.0
        %1104 = vmatpush1.msra.mxu0 0.0
        %1105 = vmatprep.subr.mxu0 0.0
        %1106 = vmatpush1.msra.mxu0 0.0
        %1107 = vmatprep.subr.mxu0 0.0
        %1108 = vmatpush1.msra.mxu0 0.0
        %1109 = vmatprep.subr.mxu0 0.0
        %1110 = vmatpush1.msra.mxu0 0.0
        %1111 = vmatprep.subr.mxu0 0.0
        %1112 = vmatpush1.msra.mxu0 0.0
        %1113 = vmatprep.subr.mxu0 0.0
        %1114 = vmatpush1.msra.mxu0 0.0
        %1115 = vmatprep.subr.mxu0 0.0
        %1116 = vmatpush1.msra.mxu0 0.0
        %1117 = vmatprep.subr.mxu0 0.0
        %1118 = vmatpush1.msra.mxu0 0.0
        %1119 = vmatprep.subr.mxu0 0.0
        %1120 = vmatpush1.msra.mxu0 0.0
        %1121 = vmatprep.subr.mxu0 0.0
        %1122 = vmatpush1.msra.mxu0 0.0
        %1123 = vmatprep.subr.mxu0 0.0
        %1124 = vmatpush1.msra.mxu0 0.0
        %1125 = vmatprep.mubr.f32.mxu0 0.0
        %1126 = vmatmul.mubr.f32.gmra.mrb[0].mxu0 %v1059
        %v1127 = vpop.f32.mrb[0].mxu0
        %v1128 = vadd.f32 0.0, %v1127
        %v1129 = vpop.f32.mrb[0].mxu0
        %1130 = vdwg.mxu0
        %1131 = vrot.lane.b32.xlu0 %v805, 112
        %v1132 = vpop.permute.xlu0 %1131
        %1133 = vrot.lane.b32.xlu0 %v804, 88
        %v1134 = vpop.permute.xlu0 %1133
        %v1135 = vsel %vm810, %v1132, 0
        %v1137 = vsel %vm810, %v1134, 0
        %1139 = vmatprep.subr.mxu0 0.0
        %1140 = vmatpush1.xpose.msra.mxu0 %v1137
        %1141 = vmatprep.subr.mxu0 0.0
        %1142 = vmatpush1.xpose.msra.mxu0 0.0
        %1143 = vmatprep.subr.mxu0 0.0
        %1144 = vmatpush1.xpose.msra.mxu0 0.0
        %1145 = vmatprep.subr.mxu0 0.0
        %1146 = vmatpush1.xpose.msra.mxu0 0.0
        %1147 = vmatprep.subr.mxu0 0.0
        %1148 = vmatpush1.xpose.msra.mxu0 0.0
        %1149 = vmatprep.subr.mxu0 0.0
        %1150 = vmatpush1.xpose.msra.mxu0 0.0
        %1151 = vmatprep.subr.mxu0 0.0
        %1152 = vmatpush1.xpose.msra.mxu0 0.0
        %1153 = vmatprep.subr.mxu0 0.0
        %1154 = vmatpush1.xpose.msra.mxu0 0.0
        %1155 = vmatprep.subr.mxu0 0.0
        %1156 = vmatpush1.xpose.msra.mxu0 0.0
        %1157 = vmatprep.subr.mxu0 0.0
        %1158 = vmatpush1.xpose.msra.mxu0 0.0
        %1159 = vmatprep.subr.mxu0 0.0
        %1160 = vmatpush1.xpose.msra.mxu0 0.0
        %1161 = vmatprep.subr.mxu0 0.0
        %1162 = vmatpush1.xpose.msra.mxu0 0.0
        %1163 = vmatprep.subr.mxu0 0.0
        %1164 = vmatpush1.xpose.msra.mxu0 0.0
        %1165 = vmatprep.subr.mxu0 0.0
        %1166 = vmatpush1.xpose.msra.mxu0 0.0
        %1167 = vmatprep.subr.mxu0 0.0
        %1168 = vmatpush1.xpose.msra.mxu0 0.0
        %1169 = vmatprep.subr.mxu0 0.0
        %1170 = vmatpush1.xpose.msra.mxu0 0.0
        %1171 = vmatprep.subr.mxu0 0.0
        %1172 = vmatpush1.xpose.msra.mxu0 0.0
        %1173 = vmatprep.subr.mxu0 0.0
        %1174 = vmatpush1.xpose.msra.mxu0 0.0
        %1175 = vmatprep.subr.mxu0 0.0
        %1176 = vmatpush1.xpose.msra.mxu0 0.0
        %1177 = vmatprep.subr.mxu0 0.0
        %1178 = vmatpush1.xpose.msra.mxu0 0.0
        %1179 = vmatprep.subr.mxu0 0.0
        %1180 = vmatpush1.xpose.msra.mxu0 0.0
        %1181 = vmatprep.subr.mxu0 0.0
        %1182 = vmatpush1.xpose.msra.mxu0 0.0
        %1183 = vmatprep.subr.mxu0 0.0
        %1184 = vmatpush1.xpose.msra.mxu0 0.0
        %1185 = vmatprep.subr.mxu0 0.0
        %1186 = vmatpush1.xpose.msra.mxu0 0.0
        %1187 = vmatprep.subr.mxu0 0.0
        %1188 = vmatpush1.xpose.msra.mxu0 0.0
        %1189 = vmatprep.subr.mxu0 0.0
        %1190 = vmatpush1.xpose.msra.mxu0 0.0
        %1191 = vmatprep.subr.mxu0 0.0
        %1192 = vmatpush1.xpose.msra.mxu0 0.0
        %1193 = vmatprep.subr.mxu0 0.0
        %1194 = vmatpush1.xpose.msra.mxu0 0.0
        %1195 = vmatprep.subr.mxu0 0.0
        %1196 = vmatpush1.xpose.msra.mxu0 0.0
        %1197 = vmatprep.subr.mxu0 0.0
        %1198 = vmatpush1.xpose.msra.mxu0 0.0
        %1199 = vmatprep.subr.mxu0 0.0
        %1200 = vmatpush1.xpose.msra.mxu0 0.0
        %1201 = vmatprep.subr.mxu0 0.0
        %1202 = vmatpush1.xpose.msra.mxu0 0.0
        %1203 = vmatprep.mubr.f32.mxu0 0.0
        %1204 = vmatmul.mubr.f32.gmra.mrb[0].mxu0 %v1135
        %v1205 = vpop.f32.mrb[0].mxu0
        %v1206 = vadd.f32 %v806, %v1205
        %v1207 = vpop.f32.mrb[0].mxu0
        %1208 = vdwg.mxu0
        %v1209 = vsel %vm810, %v1206, -inf
        %1210 = vmax.xlane.f32.xlu0 %v1209
        %v1211 = vpop.xlane.xlu0 %1210
        %v1212 = vsub.f32 %v1206, %v1211
        %v1213 = vmul.f32 %v1212, 1.442695
        %v1214 = vpow.pop %v1213
        %v1215 = vsel %vm810, %v1214, 0.0
        %1216 = vadd.xlane.f32.xlu0 %v1215
        %v1217 = vpop.xlane.xlu0 %1216
        %v1218 = vrcp.pop %v1217
        %v1219 = vmul.f32 %v1214, %v1218
        %1220 = vrot.lane.b32.xlu0 %v804, 72
        %v1221 = vpop.permute.xlu0 %1220
        %v1224 = vsel %vm810, %v1219, 0
        %1226 = vmatprep.subr.mxu0 0.0
        %1227 = vmatpush1.msra.mxu0 %v1221
        %1228 = vmatprep.subr.mxu0 0.0
        %1229 = vmatpush1.msra.mxu0 0.0
        %1230 = vmatprep.subr.mxu0 0.0
        %1231 = vmatpush1.msra.mxu0 0.0
        %1232 = vmatprep.subr.mxu0 0.0
        %1233 = vmatpush1.msra.mxu0 0.0
        %1234 = vmatprep.subr.mxu0 0.0
        %1235 = vmatpush1.msra.mxu0 0.0
        %1236 = vmatprep.subr.mxu0 0.0
        %1237 = vmatpush1.msra.mxu0 0.0
        %1238 = vmatprep.subr.mxu0 0.0
        %1239 = vmatpush1.msra.mxu0 0.0
        %1240 = vmatprep.subr.mxu0 0.0
        %1241 = vmatpush1.msra.mxu0 0.0
        %1242 = vmatprep.subr.mxu0 0.0
        %1243 = vmatpush1.msra.mxu0 0.0
        %1244 = vmatprep.subr.mxu0 0.0
        %1245 = vmatpush1.msra.mxu0 0.0
        %1246 = vmatprep.subr.mxu0 0.0
        %1247 = vmatpush1.msra.mxu0 0.0
        %1248 = vmatprep.subr.mxu0 0.0
        %1249 = vmatpush1.msra.mxu0 0.0
        %1250 = vmatprep.subr.mxu0 0.0
        %1251 = vmatpush1.msra.mxu0 0.0
        %1252 = vmatprep.subr.mxu0 0.0
        %1253 = vmatpush1.msra.mxu0 0.0
        %1254 = vmatprep.subr.mxu0 0.0
        %1255 = vmatpush1.msra.mxu0 0.0
        %1256 = vmatprep.subr.mxu0 0.0
        %1257 = vmatpush1.msra.mxu0 0.0
        %1258 = vmatprep.subr.mxu0 0.0
        %1259 = vmatpush1.msra.mxu0 0.0
        %1260 = vmatprep.subr.mxu0 0.0
        %1261 = vmatpush1.msra.mxu0 0.0
        %1262 = vmatprep.subr.mxu0 0.0
        %1263 = vmatpush1.msra.mxu0 0.0
        %1264 = vmatprep.subr.mxu0 0.0
        %1265 = vmatpush1.msra.mxu0 0.0
        %1266 = vmatprep.subr.mxu0 0.0
        %1267 = vmatpush1.msra.mxu0 0.0
        %1268 = vmatprep.subr.mxu0 0.0
        %1269 = vmatpush1.msra.mxu0 0.0
        %1270 = vmatprep.subr.mxu0 0.0
        %1271 = vmatpush1.msra.mxu0 0.0
        %1272 = vmatprep.subr.mxu0 0.0
        %1273 = vmatpush1.msra.mxu0 0.0
        %1274 = vmatprep.subr.mxu0 0.0
        %1275 = vmatpush1.msra.mxu0 0.0
        %1276 = vmatprep.subr.mxu0 0.0
        %1277 = vmatpush1.msra.mxu0 0.0
        %1278 = vmatprep.subr.mxu0 0.0
        %1279 = vmatpush1.msra.mxu0 0.0
        %1280 = vmatprep.subr.mxu0 0.0
        %1281 = vmatpush1.msra.mxu0 0.0
        %1282 = vmatprep.subr.mxu0 0.0
        %1283 = vmatpush1.msra.mxu0 0.0
        %1284 = vmatprep.subr.mxu0 0.0
        %1285 = vmatpush1.msra.mxu0 0.0
        %1286 = vmatprep.subr.mxu0 0.0
        %1287 = vmatpush1.msra.mxu0 0.0
        %1288 = vmatprep.subr.mxu0 0.0
        %1289 = vmatpush1.msra.mxu0 0.0
        %1290 = vmatprep.mubr.f32.mxu0 0.0
        %1291 = vmatmul.mubr.f32.gmra.mrb[0].mxu0 %v1224
        %v1292 = vpop.f32.mrb[0].mxu0
        %v1293 = vadd.f32 0.0, %v1292
        %v1294 = vpop.f32.mrb[0].mxu0
        %1295 = vdwg.mxu0
        %1296 = vrot.lane.b32.xlu0 %v805, 104
        %v1297 = vpop.permute.xlu0 %1296
        %v1298 = vsel %vm810, %v1297, 0
        %1300 = vmatprep.subr.mxu0 0.0
        %1301 = vmatpush1.xpose.msra.mxu0 %v1137
        %1302 = vmatprep.subr.mxu0 0.0
        %1303 = vmatpush1.xpose.msra.mxu0 0.0
        %1304 = vmatprep.subr.mxu0 0.0
        %1305 = vmatpush1.xpose.msra.mxu0 0.0
        %1306 = vmatprep.subr.mxu0 0.0
        %1307 = vmatpush1.xpose.msra.mxu0 0.0
        %1308 = vmatprep.subr.mxu0 0.0
        %1309 = vmatpush1.xpose.msra.mxu0 0.0
        %1310 = vmatprep.subr.mxu0 0.0
        %1311 = vmatpush1.xpose.msra.mxu0 0.0
        %1312 = vmatprep.subr.mxu0 0.0
        %1313 = vmatpush1.xpose.msra.mxu0 0.0
        %1314 = vmatprep.subr.mxu0 0.0
        %1315 = vmatpush1.xpose.msra.mxu0 0.0
        %1316 = vmatprep.subr.mxu0 0.0
        %1317 = vmatpush1.xpose.msra.mxu0 0.0
        %1318 = vmatprep.subr.mxu0 0.0
        %1319 = vmatpush1.xpose.msra.mxu0 0.0
        %1320 = vmatprep.subr.mxu0 0.0
        %1321 = vmatpush1.xpose.msra.mxu0 0.0
        %1322 = vmatprep.subr.mxu0 0.0
        %1323 = vmatpush1.xpose.msra.mxu0 0.0
        %1324 = vmatprep.subr.mxu0 0.0
        %1325 = vmatpush1.xpose.msra.mxu0 0.0
        %1326 = vmatprep.subr.mxu0 0.0
        %1327 = vmatpush1.xpose.msra.mxu0 0.0
        %1328 = vmatprep.subr.mxu0 0.0
        %1329 = vmatpush1.xpose.msra.mxu0 0.0
        %1330 = vmatprep.subr.mxu0 0.0
        %1331 = vmatpush1.xpose.msra.mxu0 0.0
        %1332 = vmatprep.subr.mxu0 0.0
        %1333 = vmatpush1.xpose.msra.mxu0 0.0
        %1334 = vmatprep.subr.mxu0 0.0
        %1335 = vmatpush1.xpose.msra.mxu0 0.0
        %1336 = vmatprep.subr.mxu0 0.0
        %1337 = vmatpush1.xpose.msra.mxu0 0.0
        %1338 = vmatprep.subr.mxu0 0.0
        %1339 = vmatpush1.xpose.msra.mxu0 0.0
        %1340 = vmatprep.subr.mxu0 0.0
        %1341 = vmatpush1.xpose.msra.mxu0 0.0
        %1342 = vmatprep.subr.mxu0 0.0
        %1343 = vmatpush1.xpose.msra.mxu0 0.0
        %1344 = vmatprep.subr.mxu0 0.0
        %1345 = vmatpush1.xpose.msra.mxu0 0.0
        %1346 = vmatprep.subr.mxu0 0.0
        %1347 = vmatpush1.xpose.msra.mxu0 0.0
        %1348 = vmatprep.subr.mxu0 0.0
        %1349 = vmatpush1.xpose.msra.mxu0 0.0
        %1350 = vmatprep.subr.mxu0 0.0
        %1351 = vmatpush1.xpose.msra.mxu0 0.0
        %1352 = vmatprep.subr.mxu0 0.0
        %1353 = vmatpush1.xpose.msra.mxu0 0.0
        %1354 = vmatprep.subr.mxu0 0.0
        %1355 = vmatpush1.xpose.msra.mxu0 0.0
        %1356 = vmatprep.subr.mxu0 0.0
        %1357 = vmatpush1.xpose.msra.mxu0 0.0
        %1358 = vmatprep.subr.mxu0 0.0
        %1359 = vmatpush1.xpose.msra.mxu0 0.0
        %1360 = vmatprep.subr.mxu0 0.0
        %1361 = vmatpush1.xpose.msra.mxu0 0.0
        %1362 = vmatprep.subr.mxu0 0.0
        %1363 = vmatpush1.xpose.msra.mxu0 0.0
        %1364 = vmatprep.mubr.f32.mxu0 0.0
        %1365 = vmatmul.mubr.f32.gmra.mrb[0].mxu0 %v1298
        %v1366 = vpop.f32.mrb[0].mxu0
        %v1367 = vadd.f32 %v806, %v1366
        %v1368 = vpop.f32.mrb[0].mxu0
        %1369 = vdwg.mxu0
        %v1370 = vsel %vm810, %v1367, -inf
        %1371 = vmax.xlane.f32.xlu0 %v1370
        %v1372 = vpop.xlane.xlu0 %1371
        %v1373 = vsub.f32 %v1367, %v1372
        %v1374 = vmul.f32 %v1373, 1.442695
        %v1375 = vpow.pop %v1374
        %v1376 = vsel %vm810, %v1375, 0.0
        %1377 = vadd.xlane.f32.xlu0 %v1376
        %v1378 = vpop.xlane.xlu0 %1377
        %v1379 = vrcp.pop %v1378
        %v1380 = vmul.f32 %v1375, %v1379
        %v1382 = vsel %vm810, %v1380, 0
        %1384 = vmatprep.subr.mxu0 0.0
        %1385 = vmatpush1.msra.mxu0 %v1221
        %1386 = vmatprep.subr.mxu0 0.0
        %1387 = vmatpush1.msra.mxu0 0.0
        %1388 = vmatprep.subr.mxu0 0.0
        %1389 = vmatpush1.msra.mxu0 0.0
        %1390 = vmatprep.subr.mxu0 0.0
        %1391 = vmatpush1.msra.mxu0 0.0
        %1392 = vmatprep.subr.mxu0 0.0
        %1393 = vmatpush1.msra.mxu0 0.0
        %1394 = vmatprep.subr.mxu0 0.0
        %1395 = vmatpush1.msra.mxu0 0.0
        %1396 = vmatprep.subr.mxu0 0.0
        %1397 = vmatpush1.msra.mxu0 0.0
        %1398 = vmatprep.subr.mxu0 0.0
        %1399 = vmatpush1.msra.mxu0 0.0
        %1400 = vmatprep.subr.mxu0 0.0
        %1401 = vmatpush1.msra.mxu0 0.0
        %1402 = vmatprep.subr.mxu0 0.0
        %1403 = vmatpush1.msra.mxu0 0.0
        %1404 = vmatprep.subr.mxu0 0.0
        %1405 = vmatpush1.msra.mxu0 0.0
        %1406 = vmatprep.subr.mxu0 0.0
        %1407 = vmatpush1.msra.mxu0 0.0
        %1408 = vmatprep.subr.mxu0 0.0
        %1409 = vmatpush1.msra.mxu0 0.0
        %1410 = vmatprep.subr.mxu0 0.0
        %1411 = vmatpush1.msra.mxu0 0.0
        %1412 = vmatprep.subr.mxu0 0.0
        %1413 = vmatpush1.msra.mxu0 0.0
        %1414 = vmatprep.subr.mxu0 0.0
        %1415 = vmatpush1.msra.mxu0 0.0
        %1416 = vmatprep.subr.mxu0 0.0
        %1417 = vmatpush1.msra.mxu0 0.0
        %1418 = vmatprep.subr.mxu0 0.0
        %1419 = vmatpush1.msra.mxu0 0.0
        %1420 = vmatprep.subr.mxu0 0.0
        %1421 = vmatpush1.msra.mxu0 0.0
        %1422 = vmatprep.subr.mxu0 0.0
        %1423 = vmatpush1.msra.mxu0 0.0
        %1424 = vmatprep.subr.mxu0 0.0
        %1425 = vmatpush1.msra.mxu0 0.0
        %1426 = vmatprep.subr.mxu0 0.0
        %1427 = vmatpush1.msra.mxu0 0.0
        %1428 = vmatprep.subr.mxu0 0.0
        %1429 = vmatpush1.msra.mxu0 0.0
        %1430 = vmatprep.subr.mxu0 0.0
        %1431 = vmatpush1.msra.mxu0 0.0
        %1432 = vmatprep.subr.mxu0 0.0
        %1433 = vmatpush1.msra.mxu0 0.0
        %1434 = vmatprep.subr.mxu0 0.0
        %1435 = vmatpush1.msra.mxu0 0.0
        %1436 = vmatprep.subr.mxu0 0.0
        %1437 = vmatpush1.msra.mxu0 0.0
        %1438 = vmatprep.subr.mxu0 0.0
        %1439 = vmatpush1.msra.mxu0 0.0
        %1440 = vmatprep.subr.mxu0 0.0
        %1441 = vmatpush1.msra.mxu0 0.0
        %1442 = vmatprep.subr.mxu0 0.0
        %1443 = vmatpush1.msra.mxu0 0.0
        %1444 = vmatprep.subr.mxu0 0.0
        %1445 = vmatpush1.msra.mxu0 0.0
        %1446 = vmatprep.subr.mxu0 0.0
        %1447 = vmatpush1.msra.mxu0 0.0
        %1448 = vmatprep.mubr.f32.mxu0 0.0
        %1449 = vmatmul.mubr.f32.gmra.mrb[0].mxu0 %v1382
        %v1450 = vpop.f32.mrb[0].mxu0
        %v1451 = vadd.f32 0.0, %v1450
        %v1452 = vpop.f32.mrb[0].mxu0
        %1453 = vdwg.mxu0
        %1455 = vrot.lane.b32.xlu0 %v1128, 8
        %v1456 = vpop.permute.xlu0 %1455
        %1459 = vrot.lane.b32.xlu0 %v1293, 16
        %v1460 = vpop.permute.xlu0 %1459
        %1463 = vrot.lane.b32.xlu0 %v1451, 24
        %v1464 = vpop.permute.xlu0 %1463
        %v1466 = vsel %vm810, %v970, %v1456
        %vm1467 = vcmask 130048
        %v1468 = vsel %vm1467, %v1466, %v1460
        %vm1469 = vcmask 195584
        %v1470 = vsel %vm1469, %v1468, %v1464
        %v1471 = vld [vmem:[%s604] sm:$0xff]
        %v1472 = vld [vmem:[%s604 + $0x8] sm:$0xff]
        %v1473 = vld [vmem:[%s604 + $0x10] sm:$0xff]
        %v1474 = vld [vmem:[%s604 + $0x18] sm:$0xff]
        %v1476 = vsel %vm632, %v1470, 0
        %1478 = vmatprep.subr.mxu0 0.0
        %1479 = vmatpush1.msra.mxu0 %v1471
        %1480 = vmatprep.subr.mxu0 0.0
        %1481 = vmatpush1.msra.mxu0 %v1472
        %1482 = vmatprep.subr.mxu0 0.0
        %1483 = vmatpush1.msra.mxu0 %v1473
        %1484 = vmatprep.subr.mxu0 0.0
        %1485 = vmatpush1.msra.mxu0 %v1474
        %1486 = vmatprep.subr.mxu0 0.0
        %1487 = vmatpush1.msra.mxu0 0.0
        %1488 = vmatprep.subr.mxu0 0.0
        %1489 = vmatpush1.msra.mxu0 0.0
        %1490 = vmatprep.subr.mxu0 0.0
        %1491 = vmatpush1.msra.mxu0 0.0
        %1492 = vmatprep.subr.mxu0 0.0
        %1493 = vmatpush1.msra.mxu0 0.0
        %1494 = vmatprep.subr.mxu0 0.0
        %1495 = vmatpush1.msra.mxu0 0.0
        %1496 = vmatprep.subr.mxu0 0.0
        %1497 = vmatpush1.msra.mxu0 0.0
        %1498 = vmatprep.subr.mxu0 0.0
        %1499 = vmatpush1.msra.mxu0 0.0
        %1500 = vmatprep.subr.mxu0 0.0
        %1501 = vmatpush1.msra.mxu0 0.0
        %1502 = vmatprep.subr.mxu0 0.0
        %1503 = vmatpush1.msra.mxu0 0.0
        %1504 = vmatprep.subr.mxu0 0.0
        %1505 = vmatpush1.msra.mxu0 0.0
        %1506 = vmatprep.subr.mxu0 0.0
        %1507 = vmatpush1.msra.mxu0 0.0
        %1508 = vmatprep.subr.mxu0 0.0
        %1509 = vmatpush1.msra.mxu0 0.0
        %1510 = vmatprep.subr.mxu0 0.0
        %1511 = vmatpush1.msra.mxu0 0.0
        %1512 = vmatprep.subr.mxu0 0.0
        %1513 = vmatpush1.msra.mxu0 0.0
        %1514 = vmatprep.subr.mxu0 0.0
        %1515 = vmatpush1.msra.mxu0 0.0
        %1516 = vmatprep.subr.mxu0 0.0
        %1517 = vmatpush1.msra.mxu0 0.0
        %1518 = vmatprep.subr.mxu0 0.0
        %1519 = vmatpush1.msra.mxu0 0.0
        %1520 = vmatprep.subr.mxu0 0.0
        %1521 = vmatpush1.msra.mxu0 0.0
        %1522 = vmatprep.subr.mxu0 0.0
        %1523 = vmatpush1.msra.mxu0 0.0
        %1524 = vmatprep.subr.mxu0 0.0
        %1525 = vmatpush1.msra.mxu0 0.0
        %1526 = vmatprep.subr.mxu0 0.0
        %1527 = vmatpush1.msra.mxu0 0.0
        %1528 = vmatprep.subr.mxu0 0.0
        %1529 = vmatpush1.msra.mxu0 0.0
        %1530 = vmatprep.subr.mxu0 0.0
        %1531 = vmatpush1.msra.mxu0 0.0
        %1532 = vmatprep.subr.mxu0 0.0
        %1533 = vmatpush1.msra.mxu0 0.0
        %1534 = vmatprep.subr.mxu0 0.0
        %1535 = vmatpush1.msra.mxu0 0.0
        %1536 = vmatprep.subr.mxu0 0.0
        %1537 = vmatpush1.msra.mxu0 0.0
        %1538 = vmatprep.subr.mxu0 0.0
        %1539 = vmatpush1.msra.mxu0 0.0
        %1540 = vmatprep.subr.mxu0 0.0
        %1541 = vmatpush1.msra.mxu0 0.0
        %1542 = vmatprep.mubr.f32.mxu0 0.0
        %1543 = vmatmul.mubr.f32.gmra.mrb[0].mxu0 %v1476
        %v1544 = vpop.f32.mrb[0].mxu0
        %v1545 = vadd.f32 0.0, %v1544
        %v1546 = vpop.f32.mrb[0].mxu0
        %1547 = vdwg.mxu0
        %v1548 = vadd.f32 %v630, %v1545
        %v1549 = vmul.f32 %v1548, %v1548
        %v1550 = vsel %vm632, %v1549, 0.0
        %1551 = vadd.xlane.f32.xlu0 %v1550
        %v1552 = vpop.xlane.xlu0 %1551
        %v1553 = vmul.f32 %v1552, %v636
        %v1554 = vadd.f32 %v1553, 1e-05
        %v1555 = vrsqrt.pop %v1554
        %v1556 = vmul.f32 %v1548, %v1555
        %v1557 = vld [vmem:[%s607] sm:$0x1]
        %v1559 = vlaneseq
        %v1560 = vshrl.u32 %v1559, 7
        %v1561 = vsub.s32 0, %v1560
        %v1562 = vrot.slane %v1557, %v1561
        %v1564 = vmul.f32 %v1556, %v1562
        %v1565 = vld [vmem:[%s612] sm:$0xff]
        %v1566 = vld [vmem:[%s612 + $0x8] sm:$0xff]
        %v1567 = vld [vmem:[%s612 + $0x10] sm:$0xff]
        %v1568 = vld [vmem:[%s612 + $0x18] sm:$0xff]
        %v1570 = vsel %vm632, %v1564, 0
        %1572 = vmatprep.subr.mxu0 0.0
        %1573 = vmatpush1.msra.mxu0 %v1565
        %1574 = vmatprep.subr.mxu0 0.0
        %1575 = vmatpush1.msra.mxu0 %v1566
        %1576 = vmatprep.subr.mxu0 0.0
        %1577 = vmatpush1.msra.mxu0 %v1567
        %1578 = vmatprep.subr.mxu0 0.0
        %1579 = vmatpush1.msra.mxu0 %v1568
        %1580 = vmatprep.subr.mxu0 0.0
        %1581 = vmatpush1.msra.mxu0 0.0
        %1582 = vmatprep.subr.mxu0 0.0
        %1583 = vmatpush1.msra.mxu0 0.0
        %1584 = vmatprep.subr.mxu0 0.0
        %1585 = vmatpush1.msra.mxu0 0.0
        %1586 = vmatprep.subr.mxu0 0.0
        %1587 = vmatpush1.msra.mxu0 0.0
        %1588 = vmatprep.subr.mxu0 0.0
        %1589 = vmatpush1.msra.mxu0 0.0
        %1590 = vmatprep.subr.mxu0 0.0
        %1591 = vmatpush1.msra.mxu0 0.0
        %1592 = vmatprep.subr.mxu0 0.0
        %1593 = vmatpush1.msra.mxu0 0.0
        %1594 = vmatprep.subr.mxu0 0.0
        %1595 = vmatpush1.msra.mxu0 0.0
        %1596 = vmatprep.subr.mxu0 0.0
        %1597 = vmatpush1.msra.mxu0 0.0
        %1598 = vmatprep.subr.mxu0 0.0
        %1599 = vmatpush1.msra.mxu0 0.0
        %1600 = vmatprep.subr.mxu0 0.0
        %1601 = vmatpush1.msra.mxu0 0.0
        %1602 = vmatprep.subr.mxu0 0.0
        %1603 = vmatpush1.msra.mxu0 0.0
        %1604 = vmatprep.subr.mxu0 0.0
        %1605 = vmatpush1.msra.mxu0 0.0
        %1606 = vmatprep.subr.mxu0 0.0
        %1607 = vmatpush1.msra.mxu0 0.0
        %1608 = vmatprep.subr.mxu0 0.0
        %1609 = vmatpush1.msra.mxu0 0.0
        %1610 = vmatprep.subr.mxu0 0.0
        %1611 = vmatpush1.msra.mxu0 0.0
        %1612 = vmatprep.subr.mxu0 0.0
        %1613 = vmatpush1.msra.mxu0 0.0
        %1614 = vmatprep.subr.mxu0 0.0
        %1615 = vmatpush1.msra.mxu0 0.0
        %1616 = vmatprep.subr.mxu0 0.0
        %1617 = vmatpush1.msra.mxu0 0.0
        %1618 = vmatprep.subr.mxu0 0.0
        %1619 = vmatpush1.msra.mxu0 0.0
        %1620 = vmatprep.subr.mxu0 0.0
        %1621 = vmatpush1.msra.mxu0 0.0
        %1622 = vmatprep.subr.mxu0 0.0
        %1623 = vmatpush1.msra.mxu0 0.0
        %1624 = vmatprep.subr.mxu0 0.0
        %1625 = vmatpush1.msra.mxu0 0.0
        %1626 = vmatprep.subr.mxu0 0.0
        %1627 = vmatpush1.msra.mxu0 0.0
        %1628 = vmatprep.subr.mxu0 0.0
        %1629 = vmatpush1.msra.mxu0 0.0
        %1630 = vmatprep.subr.mxu0 0.0
        %1631 = vmatpush1.msra.mxu0 0.0
        %1632 = vmatprep.subr.mxu0 0.0
        %1633 = vmatpush1.msra.mxu0 0.0
        %1634 = vmatprep.subr.mxu0 0.0
        %1635 = vmatpush1.msra.mxu0 0.0
        %1636 = vmatprep.mubr.f32.mxu0 0.0
        %1637 = vmatmul.mubr.f32.gmra.mrb[0].mxu0 %v1570
        %v1638 = vpop.f32.mrb[0].mxu0
        %v1639 = vadd.f32 0.0, %v1638
        %v1640 = vpop.f32.mrb[0].mxu0
        %1641 = vdwg.mxu0
        %v1642 = vld [vmem:[%s617] sm:$0xff]
        %v1643 = vld [vmem:[%s617 + $0x8] sm:$0xff]
        %v1644 = vld [vmem:[%s617 + $0x10] sm:$0xff]
        %v1645 = vld [vmem:[%s617 + $0x18] sm:$0xff]
        %1646 = vmatprep.subr.mxu0 0.0
        %1647 = vmatpush1.msra.mxu0 %v1642
        %1648 = vmatprep.subr.mxu0 0.0
        %1649 = vmatpush1.msra.mxu0 %v1643
        %1650 = vmatprep.subr.mxu0 0.0
        %1651 = vmatpush1.msra.mxu0 %v1644
        %1652 = vmatprep.subr.mxu0 0.0
        %1653 = vmatpush1.msra.mxu0 %v1645
        %1654 = vmatprep.subr.mxu0 0.0
        %1655 = vmatpush1.msra.mxu0 0.0
        %1656 = vmatprep.subr.mxu0 0.0
        %1657 = vmatpush1.msra.mxu0 0.0
        %1658 = vmatprep.subr.mxu0 0.0
        %1659 = vmatpush1.msra.mxu0 0.0
        %1660 = vmatprep.subr.mxu0 0.0
        %1661 = vmatpush1.msra.mxu0 0.0
        %1662 = vmatprep.subr.mxu0 0.0
        %1663 = vmatpush1.msra.mxu0 0.0
        %1664 = vmatprep.subr.mxu0 0.0
        %1665 = vmatpush1.msra.mxu0 0.0
        %1666 = vmatprep.subr.mxu0 0.0
        %1667 = vmatpush1.msra.mxu0 0.0
        %1668 = vmatprep.subr.mxu0 0.0
        %1669 = vmatpush1.msra.mxu0 0.0
        %1670 = vmatprep.subr.mxu0 0.0
        %1671 = vmatpush1.msra.mxu0 0.0
        %1672 = vmatprep.subr.mxu0 0.0
        %1673 = vmatpush1.msra.mxu0 0.0
        %1674 = vmatprep.subr.mxu0 0.0
        %1675 = vmatpush1.msra.mxu0 0.0
        %1676 = vmatprep.subr.mxu0 0.0
        %1677 = vmatpush1.msra.mxu0 0.0
        %1678 = vmatprep.subr.mxu0 0.0
        %1679 = vmatpush1.msra.mxu0 0.0
        %1680 = vmatprep.subr.mxu0 0.0
        %1681 = vmatpush1.msra.mxu0 0.0
        %1682 = vmatprep.subr.mxu0 0.0
        %1683 = vmatpush1.msra.mxu0 0.0
        %1684 = vmatprep.subr.mxu0 0.0
        %1685 = vmatpush1.msra.mxu0 0.0
        %1686 = vmatprep.subr.mxu0 0.0
        %1687 = vmatpush1.msra.mxu0 0.0
        %1688 = vmatprep.subr.mxu0 0.0
        %1689 = vmatpush1.msra.mxu0 0.0
        %1690 = vmatprep.subr.mxu0 0.0
        %1691 = vmatpush1.msra.mxu0 0.0
        %1692 = vmatprep.subr.mxu0 0.0
        %1693 = vmatpush1.msra.mxu0 0.0
        %1694 = vmatprep.subr.mxu0 0.0
        %1695 = vmatpush1.msra.mxu0 0.0
        %1696 = vmatprep.subr.mxu0 0.0
        %1697 = vmatpush1.msra.mxu0 0.0
        %1698 = vmatprep.subr.mxu0 0.0
        %1699 = vmatpush1.msra.mxu0 0.0
        %1700 = vmatprep.subr.mxu0 0.0
        %1701 = vmatpush1.msra.mxu0 0.0
        %1702 = vmatprep.subr.mxu0 0.0
        %1703 = vmatpush1.msra.mxu0 0.0
        %1704 = vmatprep.subr.mxu0 0.0
        %1705 = vmatpush1.msra.mxu0 0.0
        %1706 = vmatprep.subr.mxu0 0.0
        %1707 = vmatpush1.msra.mxu0 0.0
        %1708 = vmatprep.subr.mxu0 0.0
        %1709 = vmatpush1.msra.mxu0 0.0
        %1710 = vmatprep.mubr.f32.mxu0 0.0
        %1711 = vmatmul.mubr.f32.gmra.mrb[0].mxu0 %v1570
        %v1712 = vpop.f32.mrb[0].mxu0
        %v1713 = vadd.f32 0.0, %v1712
        %v1714 = vpop.f32.mrb[0].mxu0
        %1715 = vdwg.mxu0
        %v1716 = vxor.u32 %v1639, 2147483648
        %v1717 = vmul.f32 %v1716, 1.442695
        %v1718 = vpow.pop %v1717
        %v1719 = vadd.f32 %v1718, 1.0
        %v1720 = vrcp.pop %v1719
        %v1721 = vmul.f32 1.0, %v1720
        %v1722 = vmul.f32 %v1639, %v1721
        %v1723 = vmul.f32 %v1722, %v1713
        %v1724 = vld [vmem:[%s622] sm:$0xff]
        %v1725 = vld [vmem:[%s622 + $0x8] sm:$0xff]
        %v1726 = vld [vmem:[%s622 + $0x10] sm:$0xff]
        %v1727 = vld [vmem:[%s622 + $0x18] sm:$0xff]
        %v1728 = vld [vmem:[%s622 + $0x20] sm:$0xff]
        %v1729 = vld [vmem:[%s622 + $0x28] sm:$0xff]
        %v1730 = vld [vmem:[%s622 + $0x30] sm:$0xff]
        %v1731 = vld [vmem:[%s622 + $0x38] sm:$0xff]
        %v1732 = vld [vmem:[%s622 + $0x40] sm:$0xff]
        %v1733 = vld [vmem:[%s622 + $0x48] sm:$0xff]
        %v1734 = vld [vmem:[%s622 + $0x50] sm:$0xff]
        %v1735 = vld [vmem:[%s622 + $0x58] sm:$0xff]
        %vm1736 = vcmask 785408
        %v1738 = vsel %vm1736, %v1723, 0
        %1740 = vmatprep.subr.mxu0 0.0
        %1741 = vmatpush1.msra.mxu0 %v1724
        %1742 = vmatprep.subr.mxu0 0.0
        %1743 = vmatpush1.msra.mxu0 %v1725
        %1744 = vmatprep.subr.mxu0 0.0
        %1745 = vmatpush1.msra.mxu0 %v1726
        %1746 = vmatprep.subr.mxu0 0.0
        %1747 = vmatpush1.msra.mxu0 %v1727
        %1748 = vmatprep.subr.mxu0 0.0
        %1749 = vmatpush1.msra.mxu0 %v1728
        %1750 = vmatprep.subr.mxu0 0.0
        %1751 = vmatpush1.msra.mxu0 %v1729
        %1752 = vmatprep.subr.mxu0 0.0
        %1753 = vmatpush1.msra.mxu0 %v1730
        %1754 = vmatprep.subr.mxu0 0.0
        %1755 = vmatpush1.msra.mxu0 %v1731
        %1756 = vmatprep.subr.mxu0 0.0
        %1757 = vmatpush1.msra.mxu0 %v1732
        %1758 = vmatprep.subr.mxu0 0.0
        %1759 = vmatpush1.msra.mxu0 %v1733
        %1760 = vmatprep.subr.mxu0 0.0
        %1761 = vmatpush1.msra.mxu0 %v1734
        %1762 = vmatprep.subr.mxu0 0.0
        %1763 = vmatpush1.msra.mxu0 %v1735
        %1764 = vmatprep.subr.mxu0 0.0
        %1765 = vmatpush1.msra.mxu0 0.0
        %1766 = vmatprep.subr.mxu0 0.0
        %1767 = vmatpush1.msra.mxu0 0.0
        %1768 = vmatprep.subr.mxu0 0.0
        %1769 = vmatpush1.msra.mxu0 0.0
        %1770 = vmatprep.subr.mxu0 0.0
        %1771 = vmatpush1.msra.mxu0 0.0
        %1772 = vmatprep.subr.mxu0 0.0
        %1773 = vmatpush1.msra.mxu0 0.0
        %1774 = vmatprep.subr.mxu0 0.0
        %1775 = vmatpush1.msra.mxu0 0.0
        %1776 = vmatprep.subr.mxu0 0.0
        %1777 = vmatpush1.msra.mxu0 0.0
        %1778 = vmatprep.subr.mxu0 0.0
        %1779 = vmatpush1.msra.mxu0 0.0
        %1780 = vmatprep.subr.mxu0 0.0
        %1781 = vmatpush1.msra.mxu0 0.0
        %1782 = vmatprep.subr.mxu0 0.0
        %1783 = vmatpush1.msra.mxu0 0.0
        %1784 = vmatprep.subr.mxu0 0.0
        %1785 = vmatpush1.msra.mxu0 0.0
        %1786 = vmatprep.subr.mxu0 0.0
        %1787 = vmatpush1.msra.mxu0 0.0
        %1788 = vmatprep.subr.mxu0 0.0
        %1789 = vmatpush1.msra.mxu0 0.0
        %1790 = vmatprep.subr.mxu0 0.0
        %1791 = vmatpush1.msra.mxu0 0.0
        %1792 = vmatprep.subr.mxu0 0.0
        %1793 = vmatpush1.msra.mxu0 0.0
        %1794 = vmatprep.subr.mxu0 0.0
        %1795 = vmatpush1.msra.mxu0 0.0
        %1796 = vmatprep.subr.mxu0 0.0
        %1797 = vmatpush1.msra.mxu0 0.0
        %1798 = vmatprep.subr.mxu0 0.0
        %1799 = vmatpush1.msra.mxu0 0.0
        %1800 = vmatprep.subr.mxu0 0.0
        %1801 = vmatpush1.msra.mxu0 0.0
        %1802 = vmatprep.subr.mxu0 0.0
        %1803 = vmatpush1.msra.mxu0 0.0
        %1804 = vmatprep.mubr.f32.mxu0 0.0
        %1805 = vmatmul.mubr.f32.gmra.mrb[0].mxu0 %v1738
        %v1806 = vpop.f32.mrb[0].mxu0
        %v1807 = vadd.f32 0.0, %v1806
        %v1808 = vpop.f32.mrb[0].mxu0
        %1809 = vdwg.mxu0
        %v1810 = vadd.f32 %v1548, %v1807
        %1811 = vst.msk [vmem:[#allocation2] sm:$0xff] %vm632, %v1810
        %p1812 = scmp.eq.s32.totalorder %s33, 1
        // Predicated region
        $region81: #{transformer_forward.1} parent=75 // pred_check
          %p1813 = pneg %p1812
        $region82: #{transformer_forward.1} parent=75 // pred_check_branch
          %1815 = sbr.rel (%p1813) target = $region84
        $region83: #{transformer_forward.1} parent=75 // pred_region
          %v1816 = vmul.f32 %v1810, %v1810
          %v1817 = vsel %vm632, %v1816, 0.0
          %1818 = vadd.xlane.f32.xlu0 %v1817
          %v1819 = vpop.xlane.xlu0 %1818
          %v1820 = vmul.f32 %v1819, %v636
          %v1821 = vadd.f32 %v1820, 1e-05
          %v1822 = vrsqrt.pop %v1821
          %v1823 = vmul.f32 %v1810, %v1822
          %v1824 = vld [vmem:[%s12] sm:$0x1]
          %v1826 = vlaneseq
          %v1827 = vshrl.u32 %v1826, 7
          %v1828 = vsub.s32 0, %v1827
          %v1829 = vrot.slane %v1824, %v1828
          %v1831 = vmul.f32 %v1823, %v1829
          %v1832 = vld [vmem:[%s13] sm:$0xff]
          %v1833 = vld [vmem:[%s13 + $0x8] sm:$0xff]
          %v1834 = vld [vmem:[%s13 + $0x10] sm:$0xff]
          %v1835 = vld [vmem:[%s13 + $0x18] sm:$0xff]
          %v1837 = vsel %vm632, %v1831, 0
          %1839 = vmatprep.subr.mxu0 0.0
          %1840 = vmatpush1.msra.mxu0 %v1832
          %1841 = vmatprep.subr.mxu0 0.0
          %1842 = vmatpush1.msra.mxu0 %v1833
          %1843 = vmatprep.subr.mxu0 0.0
          %1844 = vmatpush1.msra.mxu0 %v1834
          %1845 = vmatprep.subr.mxu0 0.0
          %1846 = vmatpush1.msra.mxu0 %v1835
          %1847 = vmatprep.subr.mxu0 0.0
          %1848 = vmatpush1.msra.mxu0 0.0
          %1849 = vmatprep.subr.mxu0 0.0
          %1850 = vmatpush1.msra.mxu0 0.0
          %1851 = vmatprep.subr.mxu0 0.0
          %1852 = vmatpush1.msra.mxu0 0.0
          %1853 = vmatprep.subr.mxu0 0.0
          %1854 = vmatpush1.msra.mxu0 0.0
          %1855 = vmatprep.subr.mxu0 0.0
          %1856 = vmatpush1.msra.mxu0 0.0
          %1857 = vmatprep.subr.mxu0 0.0
          %1858 = vmatpush1.msra.mxu0 0.0
          %1859 = vmatprep.subr.mxu0 0.0
          %1860 = vmatpush1.msra.mxu0 0.0
          %1861 = vmatprep.subr.mxu0 0.0
          %1862 = vmatpush1.msra.mxu0 0.0
          %1863 = vmatprep.subr.mxu0 0.0
          %1864 = vmatpush1.msra.mxu0 0.0
          %1865 = vmatprep.subr.mxu0 0.0
          %1866 = vmatpush1.msra.mxu0 0.0
          %1867 = vmatprep.subr.mxu0 0.0
          %1868 = vmatpush1.msra.mxu0 0.0
          %1869 = vmatprep.subr.mxu0 0.0
          %1870 = vmatpush1.msra.mxu0 0.0
          %1871 = vmatprep.subr.mxu0 0.0
          %1872 = vmatpush1.msra.mxu0 0.0
          %1873 = vmatprep.subr.mxu0 0.0
          %1874 = vmatpush1.msra.mxu0 0.0
          %1875 = vmatprep.subr.mxu0 0.0
          %1876 = vmatpush1.msra.mxu0 0.0
          %1877 = vmatprep.subr.mxu0 0.0
          %1878 = vmatpush1.msra.mxu0 0.0
          %1879 = vmatprep.subr.mxu0 0.0
          %1880 = vmatpush1.msra.mxu0 0.0
          %1881 = vmatprep.subr.mxu0 0.0
          %1882 = vmatpush1.msra.mxu0 0.0
          %1883 = vmatprep.subr.mxu0 0.0
          %1884 = vmatpush1.msra.mxu0 0.0
          %1885 = vmatprep.subr.mxu0 0.0
          %1886 = vmatpush1.msra.mxu0 0.0
          %1887 = vmatprep.subr.mxu0 0.0
          %1888 = vmatpush1.msra.mxu0 0.0
          %1889 = vmatprep.subr.mxu0 0.0
          %1890 = vmatpush1.msra.mxu0 0.0
          %1891 = vmatprep.subr.mxu0 0.0
          %1892 = vmatpush1.msra.mxu0 0.0
          %1893 = vmatprep.subr.mxu0 0.0
          %1894 = vmatpush1.msra.mxu0 0.0
          %1895 = vmatprep.subr.mxu0 0.0
          %1896 = vmatpush1.msra.mxu0 0.0
          %1897 = vmatprep.subr.mxu0 0.0
          %1898 = vmatpush1.msra.mxu0 0.0
          %1899 = vmatprep.subr.mxu0 0.0
          %1900 = vmatpush1.msra.mxu0 0.0
          %1901 = vmatprep.subr.mxu0 0.0
          %1902 = vmatpush1.msra.mxu0 0.0
          %1903 = vmatprep.mubr.f32.mxu0 0.0
          %1904 = vmatmul.mubr.f32.gmra.mrb[0].mxu0 %v1837
          %v1905 = vpop.f32.mrb[0].mxu0
          %v1906 = vadd.f32 0.0, %v1905
          %v1907 = vpop.f32.mrb[0].mxu0
          %1908 = vdwg.mxu0
          %vm1909 = vcmask 523264
          %1910 = vst.msk [vmem:[%s582] sm:$0xff] %vm1909, %v1906
        $region84: #{transformer_forward.1} parent=75 // pred_fallthru
          _
        %s1911 = sand.u32 %s387, 1
        %s1912 = scalar_lea.sflag [#allocation4], %s1911
        %s1913 = sand.u32 %s387, 1
        %s1914 = smul.addr %s1913, 8
        %s1915 = scalar_lea.vmem [#allocation3], %s1914
        // Predicated region
        $region85: #{transformer_forward.1} parent=75 // pred_check
          %p1916 = pneg %p397
        $region86: #{transformer_forward.1} parent=75 // pred_check_branch
          %1918 = sbr.rel (%p1916) target = $region88
        $region87: #{transformer_forward.1} parent=75 // pred_region
          %s1920 = ssub.s32 128, 128
          %1921 = vsyncadd %s1912, %s1920
          %s1922 = smul.addr %s32, 128
          %s1923 = scalar_lea.hbm %s14, %s1922
          %s1925 = sshll.u32 %s1915, 4
          %s1926 = int_to_ptr.vmem [resolvable:$true] %s1925
          %1928 = dma.vmem_to_hbm [thread:$0]  %s1926, 128, %s1923, %s1912
        $region88: #{transformer_forward.1} parent=75 // pred_fallthru
          _
      $region76: #{transformer_forward.1} parent=5 // pred_fallthru
        _
      %p1929 = scmp.le.s32.totalorder 2, %s23
      // Predicated region
      $region89: #{transformer_forward.1} parent=5 // pred_check
        %p1930 = pneg %p1929
      $region90: #{transformer_forward.1} parent=5 // pred_check_branch
        %1932 = sbr.rel (%p1930) target = $region92
      $region91: #{transformer_forward.1} parent=5 // pred_region
        %s1933 = ssub.s32 %s23, 2
        // Predicated region
        $region93: #{transformer_forward.1} parent=91 // pred_check
          %p1934 = pneg %p403
        $region94: #{transformer_forward.1} parent=91 // pred_check_branch
          %1936 = sbr.rel (%p1934) target = $region96
        $region95: #{transformer_forward.1} parent=91 // pred_region
          %s1937 = sand.u32 %s388, 1
          %s1938 = scalar_lea.sflag [#allocation4], %s1937
          %s1939 = sand.u32 %s388, 1
          %s1940 = smul.addr %s1939, 8
          %s1941 = scalar_lea.vmem [#allocation3], %s1940
          %1942 = dma.done %s1938, 128
        $region96: #{transformer_forward.1} parent=91 // pred_fallthru
          _
      $region92: #{transformer_forward.1} parent=5 // pred_fallthru
        _
    $region6: #{transformer_forward.1} parent=1 // loop_footer
      %s27 = sadd.s32 1, %s23
    $region7: #{transformer_forward.1} parent=1 // loop_footer_branch
      %22 = sbr.rel target = $region3
    $region8: #{transformer_forward.1} parent=1 // loop_exit
      _
    %1943 = vsyncpa [#allocation4], 1
    %s1944 = scalar_lea.sflag [#allocation4], 1
    %1945 = vsyncpa %s1944, 1

</llo_original>
